<compile_context>
chip_gen: v7x
topology: tpu7x:2x2x1
jax: 0.10.0
libtpu: 0.0.40
codegen_flags: <defaults>
</compile_context>

<pallas_src>
import math
import numpy as np
import jax
import jax.numpy as jnp
from jax.experimental import pallas as pl
from jax.experimental.pallas import tpu as pltpu

_TWO_PI = 2.0 * math.pi


def _round_up(x, m):
    return ((x + m - 1) // m) * m


def _sincos_turns(u):
    """Return (cos(2*pi*u), sin(2*pi*u)) with one shared range reduction.

    `u` is measured in turns.  Reduce to a quarter-turn window once and
    evaluate short Taylor polynomials (truncation error < 5e-7 on
    [-pi/2, pi/2]) instead of two independent full-range jnp.sin/jnp.cos
    reductions (sin/cos are VALU-bound on TPU).
    """
    r = u - jnp.floor(u + 0.5)            # r in (-0.5, 0.5]  (exact in f32)
    k = jnp.floor(2.0 * r + 0.5)          # k in {-1, 0, 1}
    s = r - 0.5 * k                       # s in [-0.25, 0.25]
    sign = 1.0 - 2.0 * jnp.abs(k)         # (-1)**k
    t = _TWO_PI * s                       # theta in [-pi/2, pi/2]
    t2 = t * t
    sin_p = t * (1.0 + t2 * (-1.0 / 6.0 + t2 * (1.0 / 120.0 + t2 * (
        -1.0 / 5040.0 + t2 * (1.0 / 362880.0 + t2 * (-1.0 / 39916800.0))))))
    cos_p = 1.0 + t2 * (-0.5 + t2 * (1.0 / 24.0 + t2 * (
        -1.0 / 720.0 + t2 * (1.0 / 40320.0 + t2 * (-1.0 / 3628800.0)))))
    return sign * cos_p, sign * sin_p


def _build_kernel(lo, hi, order, n_chan):
    P = order * (order + 1) // 2

    def kernel(arg_xx_ref, arg_yy_ref, abs_xx_ref, abs_yy_ref,
               h_ref, w_ref, re_ref, im_ref):
        # fabrication (no error): clip geometry to size limits
        Hc = jnp.clip(h_ref[...], lo, hi)
        Wc = jnp.clip(w_ref[...], lo, hi)

        # Power chains: W^k, H^k for k = 1..order-1 (no ones-tile multiplies).
        Wpow = [None, Wc]
        Hpow = [None, Hc]
        for _ in range(2, order):
            Wpow.append(Wpow[-1] * Wc)
            Hpow.append(Hpow[-1] * Hc)

        polys = []                          # polys[0] is the constant-1 term
        for i in range(order):
            for j in range(i + 1):
                a, b = i - j, j
                if a == 0 and b == 0:
                    polys.append(None)
                elif b == 0:
                    polys.append(Wpow[a])
                elif a == 0:
                    polys.append(Hpow[b])
                else:
                    polys.append(Wpow[a] * Hpow[b])

        coeff_sets = ((arg_xx_ref, abs_xx_ref), (arg_yy_ref, abs_yy_ref))
        for pol, (arg_ref, abs_ref) in enumerate(coeff_sets):
            for ch in range(n_chan):
                phase = None
                amp = None
                for p in range(1, P):
                    ap = arg_ref[p, ch]     # scalar coefficients live in SMEM
                    bp = abs_ref[p, ch]
                    phase = ap * polys[p] if phase is None else phase + ap * polys[p]
                    amp = bp * polys[p] if amp is None else amp + bp * polys[p]
                # Constant (p=0) coefficient folded with the -0.5 phase shift.
                u0 = arg_ref[0, ch] - 0.5
                if phase is None:           # order == 1 corner case
                    u = u0 + jnp.zeros_like(Hc)
                    amp = abs_ref[0, ch] + jnp.zeros_like(Hc)
                else:
                    u = phase + u0          # phase in turns: 2*pi*u
                    amp = amp + abs_ref[0, ch]
                cos_v, sin_v = _sincos_turns(u)
                re_ref[pol, ch] = amp * cos_v
                im_ref[pol, ch] = amp * sin_v

    return kernel


def make_proxy_meta_forward(size_limit, order, *, tile_budget_bytes=28 << 20,
                            max_th=512, max_tw=1024):
    """Build a forward fn mirroring proxy_meta.forward (meta_err=False)."""
    lo, hi = float(size_limit[0]), float(size_limit[1])
    P = order * (order + 1) // 2

    def run(H, W, arg_t_xx, arg_t_yy, abs_t_xx, abs_t_yy, channel=3):
        Rh, Rw = H.shape
        n_chan_full = arg_t_xx.shape[1]

        # Slice coefficients BEFORE the kernel when only one channel is kept.
        if channel < n_chan_full:
            sl = slice(channel, channel + 1)
            arg_xx, arg_yy = arg_t_xx[:, sl], arg_t_yy[:, sl]
            abs_xx, abs_yy = abs_t_xx[:, sl], abs_t_yy[:, sl]
        else:
            arg_xx, arg_yy = arg_t_xx, arg_t_yy
            abs_xx, abs_yy = abs_t_xx, abs_t_yy
        nc = arg_xx.shape[1]

        # --- tile selection: lane-dense, as large as the VMEM budget allows.
        # Double-buffered bytes per tile element:
        #   2 f32 inputs + 2 output slabs of (2*nc) f32 planes, x2 buffers.
        bytes_per_elem = 2 * (2 * 4 + 2 * (2 * nc) * 4)
        Rw_p = _round_up(Rw, 128)
        tw = min(Rw_p, max_tw)                     # large multiple of 128
        budget_elems = max(8 * 128, tile_budget_bytes // bytes_per_elem)
        th = max(8, min(((budget_elems // tw) // 8) * 8, max_th))
        Rh_p = _round_up(Rh, 8)
        th = min(th, Rh_p)
        # Keep >= 2 grid steps so both TensorCores get work (megacore / v7x).
        if pl.cdiv(Rh_p, th) * pl.cdiv(Rw_p, tw) < 2 and Rh_p >= 16:
            th = _round_up(pl.cdiv(Rh_p, 2), 8)

        Rh_pad = _round_up(Rh, th)
        Rw_pad = _round_up(Rw, tw)
        if (Rh_pad, Rw_pad) != (Rh, Rw):
            pad = ((0, Rh_pad - Rh), (0, Rw_pad - Rw))
            H_p = jnp.pad(H, pad, mode="edge")
            W_p = jnp.pad(W, pad, mode="edge")
        else:
            H_p, W_p = H, W

        grid = (Rh_pad // th, Rw_pad // tw)

        # Explicit VMEM limit: covers the double-buffered blocks with headroom,
        # capped safely below v7x's 64 MiB physical VMEM (also raises v5e's
        # 16 MiB scoped default when larger tiles are used).
        block_bytes = 2 * (2 * th * tw * 4 + 2 * (2 * nc) * th * tw * 4)
        vmem_limit = int(min(56 << 20, max(32 << 20, block_bytes * 5 // 4)))

        # Advisory cost estimate (sin/cos are polynomial here, not EUP ops).
        n_pix = Rh_pad * Rw_pad
        n_maps = 2 * nc
        cost = pl.CostEstimate(
            flops=int(n_pix * (4 + 3 * P + n_maps * (4 * (P - 1) + 60))),
            transcendentals=0,
            bytes_accessed=int(n_pix * 4 * (2 + 2 * n_maps)))

        smem_spec = pl.BlockSpec(memory_space=pltpu.MemorySpace.SMEM)
        geo_spec = pl.BlockSpec((th, tw), lambda i, j: (i, j))
        out_spec = pl.BlockSpec((2, nc, th, tw), lambda i, j: (0, 0, i, j))

        kernel = _build_kernel(lo, hi, order, nc)

        re, im = pl.pallas_call(
            kernel,
            out_shape=(
                jax.ShapeDtypeStruct((2, nc, Rh_pad, Rw_pad), jnp.float32),
                jax.ShapeDtypeStruct((2, nc, Rh_pad, Rw_pad), jnp.float32),
            ),
            grid_spec=pltpu.PrefetchScalarGridSpec(
                num_scalar_prefetch=0,
                grid=grid,
                in_specs=[smem_spec, smem_spec, smem_spec, smem_spec,
                          geo_spec, geo_spec],
                out_specs=[out_spec, out_spec],
            ),
            compiler_params=pltpu.CompilerParams(
                dimension_semantics=("parallel", "parallel"),
                vmem_limit_bytes=vmem_limit),
            cost_estimate=cost,
        )(arg_xx, arg_yy, abs_xx, abs_yy, H_p, W_p)

        if (Rh_pad, Rw_pad) != (Rh, Rw):
            re = re[..., :Rh, :Rw]
            im = im[..., :Rh, :Rw]

        # misalign(meta_err=False) is identity; channel slicing already applied.
        return jax.lax.complex(re, im)      # [2, nc, Rh, Rw] complex64

    return run


def reference(H, W, arg_xx, arg_yy, abs_xx, abs_yy, size_limit, order, channel=3):
    """Pure-JAX mirror of the PyTorch forward (meta_err=False)."""
    lo, hi = size_limit
    Hc = jnp.clip(H, lo, hi)
    Wc = jnp.clip(W, lo, hi)
    polys = jnp.stack([Wc ** (i - j) * Hc ** j
                       for i in range(order) for j in range(i + 1)], axis=0)
    polys = polys[:, None, None, :, :]                       # [P,1,1,Rh,Rw]

    def contract(coef):                                       # coef [P,3]
        c = coef[:, None, :, None, None]                      # [P,1,3,1,1]
        return jnp.sum(c * polys, axis=0)                     # [1,3,Rh,Rw]

    phase = jnp.concatenate([contract(arg_xx), contract(arg_yy)], axis=0)
    phase = 2.0 * jnp.pi * (phase - 0.5)
    amp = jnp.concatenate([contract(abs_xx), contract(abs_yy)], axis=0)
    out = amp * jnp.exp(1j * phase)
    if channel < 3:
        out = out[:, channel:channel + 1, :, :]
    return out


if __name__ == "__main__":
    # --- deterministic synthetic "module" setup -----------------------------
    slm_res = (16, 256)                 # small spatial resolution
    size_limit = (0.1, 0.3)             # (min, max) geometry limit
    size_init = 0.2
    meta_init_range = 1.0
    order = 3                           # -> P = 6 polynomial terms
    P = order * (order + 1) // 2
    channel = 3                         # keep all channels (no slicing)

    key = jax.random.PRNGKey(0)
    kH, kW, k1, k2, k3, k4 = jax.random.split(key, 6)

    size_range = size_limit[1] - size_limit[0]
    H = (meta_init_range * size_range *
         (-0.5 + jax.random.uniform(kH, slm_res, jnp.float32)) + size_init)
    W = (meta_init_range * size_range *
         (-0.5 + jax.random.uniform(kW, slm_res, jnp.float32)) + size_init)

    # synthetic proxy coefficients (stand-in for scipy.io.loadmat data), [P, 3]
    arg_t_xx = 0.3 * jax.random.normal(k1, (P, 3), jnp.float32)
    arg_t_yy = 0.3 * jax.random.normal(k2, (P, 3), jnp.float32)
    abs_t_xx = 0.3 * jax.random.normal(k3, (P, 3), jnp.float32)
    abs_t_yy = 0.3 * jax.random.normal(k4, (P, 3), jnp.float32)
    assert math.floor(math.sqrt(P * 2)) == order

    proxy_forward = make_proxy_meta_forward(size_limit, order)

    # --- run kernel (divisible shape) ---------------------------------------
    out = proxy_forward(H, W, arg_t_xx, arg_t_yy, abs_t_xx, abs_t_yy,
                        channel=channel)
    out = jax.block_until_ready(out)

    ref = reference(H, W, arg_t_xx, arg_t_yy, abs_t_xx, abs_t_yy,
                    size_limit, order, channel=channel)
    np.testing.assert_allclose(np.asarray(out.real), np.asarray(ref.real),
                               rtol=1e-5, atol=1e-5)
    np.testing.assert_allclose(np.asarray(out.imag), np.asarray(ref.imag),
                               rtol=1e-5, atol=1e-5)
    assert out.shape == (2, 3, *slm_res) and out.dtype == jnp.complex64

    # --- run kernel again on a non-tile-divisible shape (pad/slice path) ----
    odd_res = (20, 200)
    kH2, kW2 = jax.random.split(jax.random.PRNGKey(1), 2)
    H2 = (meta_init_range * size_range *
          (-0.5 + jax.random.uniform(kH2, odd_res, jnp.float32)) + size_init)
    W2 = (meta_init_range * size_range *
          (-0.5 + jax.random.uniform(kW2, odd_res, jnp.float32)) + size_init)
    out2 = proxy_forward(H2, W2, arg_t_xx, arg_t_yy, abs_t_xx, abs_t_yy,
                         channel=channel)
    out2 = jax.block_until_ready(out2)
    ref2 = reference(H2, W2, arg_t_xx, arg_t_yy, abs_t_xx, abs_t_yy,
                     size_limit, order, channel=channel)
    np.testing.assert_allclose(np.asarray(out2.real), np.asarray(ref2.real),
                               rtol=1e-5, atol=1e-5)
    np.testing.assert_allclose(np.asarray(out2.imag), np.asarray(ref2.imag),
                               rtol=1e-5, atol=1e-5)
    assert out2.shape == (2, 3, *odd_res) and out2.dtype == jnp.complex64

    print("KERNEL_OK")
</pallas_src>

<mosaic_0001>
module attributes {stable_mosaic.version = 11 : i64} {
  func.func @kernel(%arg0: i32, %arg1: i32, %arg2: memref<6x3xf32, #tpu.memory_space<smem>>, %arg3: memref<6x3xf32, #tpu.memory_space<smem>>, %arg4: memref<6x3xf32, #tpu.memory_space<smem>>, %arg5: memref<6x3xf32, #tpu.memory_space<smem>>, %arg6: memref<8x256xf32, #tpu.memory_space<vmem>>, %arg7: memref<8x256xf32, #tpu.memory_space<vmem>>, %arg8: memref<2x3x8x256xf32, #tpu.memory_space<vmem>>, %arg9: memref<2x3x8x256xf32, #tpu.memory_space<vmem>>) attributes {dimension_semantics = [#tpu.dimension_semantics<parallel>, #tpu.dimension_semantics<parallel>], iteration_bounds = array<i64: 2, 1>, scalar_prefetch = 0 : i64, scratch_operands = 0 : i64, tpu.core_type = #tpu.core_type<tc>, window_params = [{transform_indices = @transform_0, window_bounds = array<i64: 6, 3>}, {transform_indices = @transform_1, window_bounds = array<i64: 6, 3>}, {transform_indices = @transform_2, window_bounds = array<i64: 6, 3>}, {transform_indices = @transform_3, window_bounds = array<i64: 6, 3>}, {transform_indices = @transform_4, window_bounds = array<i64: 8, 256>}, {transform_indices = @transform_5, window_bounds = array<i64: 8, 256>}, {transform_indices = @transform_6, window_bounds = array<i64: 2, 3, 8, 256>}, {transform_indices = @transform_7, window_bounds = array<i64: 2, 3, 8, 256>}]} {
    %c0 = arith.constant 0 : index
    %c0_0 = arith.constant 0 : index
    %0 = vector.load %arg6[%c0, %c0_0] : memref<8x256xf32, #tpu.memory_space<vmem>>, vector<8x256xf32>
    %cst = arith.constant 1.000000e-01 : f32
    %cst_1 = arith.constant 3.000000e-01 : f32
    %1 = vector.broadcast %cst : f32 to vector<8x256xf32>
    %2 = arith.maximumf %1, %0 : vector<8x256xf32>
    %3 = vector.broadcast %cst_1 : f32 to vector<8x256xf32>
    %4 = arith.minimumf %3, %2 : vector<8x256xf32>
    %c0_2 = arith.constant 0 : index
    %c0_3 = arith.constant 0 : index
    %5 = vector.load %arg7[%c0_2, %c0_3] : memref<8x256xf32, #tpu.memory_space<vmem>>, vector<8x256xf32>
    %cst_4 = arith.constant 1.000000e-01 : f32
    %cst_5 = arith.constant 3.000000e-01 : f32
    %6 = vector.broadcast %cst_4 : f32 to vector<8x256xf32>
    %7 = arith.maximumf %6, %5 : vector<8x256xf32>
    %8 = vector.broadcast %cst_5 : f32 to vector<8x256xf32>
    %9 = arith.minimumf %8, %7 : vector<8x256xf32>
    %10 = arith.mulf %9, %9 : vector<8x256xf32>
    %11 = arith.mulf %4, %4 : vector<8x256xf32>
    %12 = arith.mulf %9, %4 : vector<8x256xf32>
    %c1 = arith.constant 1 : index
    %c0_6 = arith.constant 0 : index
    %13 = memref.load %arg2[%c1, %c0_6] : memref<6x3xf32, #tpu.memory_space<smem>>
    %c1_7 = arith.constant 1 : index
    %c0_8 = arith.constant 0 : index
    %14 = memref.load %arg4[%c1_7, %c0_8] : memref<6x3xf32, #tpu.memory_space<smem>>
    %15 = vector.broadcast %13 : f32 to vector<8x256xf32>
    %16 = arith.mulf %15, %9 : vector<8x256xf32>
    %17 = vector.broadcast %14 : f32 to vector<8x256xf32>
    %18 = arith.mulf %17, %9 : vector<8x256xf32>
    %c2 = arith.constant 2 : index
    %c0_9 = arith.constant 0 : index
    %19 = memref.load %arg2[%c2, %c0_9] : memref<6x3xf32, #tpu.memory_space<smem>>
    %c2_10 = arith.constant 2 : index
    %c0_11 = arith.constant 0 : index
    %20 = memref.load %arg4[%c2_10, %c0_11] : memref<6x3xf32, #tpu.memory_space<smem>>
    %21 = vector.broadcast %19 : f32 to vector<8x256xf32>
    %22 = arith.mulf %21, %4 : vector<8x256xf32>
    %23 = arith.addf %16, %22 : vector<8x256xf32>
    %24 = vector.broadcast %20 : f32 to vector<8x256xf32>
    %25 = arith.mulf %24, %4 : vector<8x256xf32>
    %26 = arith.addf %18, %25 : vector<8x256xf32>
    %c3 = arith.constant 3 : index
    %c0_12 = arith.constant 0 : index
    %27 = memref.load %arg2[%c3, %c0_12] : memref<6x3xf32, #tpu.memory_space<smem>>
    %c3_13 = arith.constant 3 : index
    %c0_14 = arith.constant 0 : index
    %28 = memref.load %arg4[%c3_13, %c0_14] : memref<6x3xf32, #tpu.memory_space<smem>>
    %29 = vector.broadcast %27 : f32 to vector<8x256xf32>
    %30 = arith.mulf %29, %10 : vector<8x256xf32>
    %31 = arith.addf %23, %30 : vector<8x256xf32>
    %32 = vector.broadcast %28 : f32 to vector<8x256xf32>
    %33 = arith.mulf %32, %10 : vector<8x256xf32>
    %34 = arith.addf %26, %33 : vector<8x256xf32>
    %c4 = arith.constant 4 : index
    %c0_15 = arith.constant 0 : index
    %35 = memref.load %arg2[%c4, %c0_15] : memref<6x3xf32, #tpu.memory_space<smem>>
    %c4_16 = arith.constant 4 : index
    %c0_17 = arith.constant 0 : index
    %36 = memref.load %arg4[%c4_16, %c0_17] : memref<6x3xf32, #tpu.memory_space<smem>>
    %37 = vector.broadcast %35 : f32 to vector<8x256xf32>
    %38 = arith.mulf %37, %12 : vector<8x256xf32>
    %39 = arith.addf %31, %38 : vector<8x256xf32>
    %40 = vector.broadcast %36 : f32 to vector<8x256xf32>
    %41 = arith.mulf %40, %12 : vector<8x256xf32>
    %42 = arith.addf %34, %41 : vector<8x256xf32>
    %c5 = arith.constant 5 : index
    %c0_18 = arith.constant 0 : index
    %43 = memref.load %arg2[%c5, %c0_18] : memref<6x3xf32, #tpu.memory_space<smem>>
    %c5_19 = arith.constant 5 : index
    %c0_20 = arith.constant 0 : index
    %44 = memref.load %arg4[%c5_19, %c0_20] : memref<6x3xf32, #tpu.memory_space<smem>>
    %45 = vector.broadcast %43 : f32 to vector<8x256xf32>
    %46 = arith.mulf %45, %11 : vector<8x256xf32>
    %47 = arith.addf %39, %46 : vector<8x256xf32>
    %48 = vector.broadcast %44 : f32 to vector<8x256xf32>
    %49 = arith.mulf %48, %11 : vector<8x256xf32>
    %50 = arith.addf %42, %49 : vector<8x256xf32>
    %c0_21 = arith.constant 0 : index
    %c0_22 = arith.constant 0 : index
    %51 = memref.load %arg2[%c0_21, %c0_22] : memref<6x3xf32, #tpu.memory_space<smem>>
    %cst_23 = arith.constant 5.000000e-01 : f32
    %52 = arith.subf %51, %cst_23 : f32
    %53 = vector.broadcast %52 : f32 to vector<8x256xf32>
    %54 = arith.addf %47, %53 : vector<8x256xf32>
    %c0_24 = arith.constant 0 : index
    %c0_25 = arith.constant 0 : index
    %55 = memref.load %arg4[%c0_24, %c0_25] : memref<6x3xf32, #tpu.memory_space<smem>>
    %56 = vector.broadcast %55 : f32 to vector<8x256xf32>
    %57 = arith.addf %50, %56 : vector<8x256xf32>
    %cst_26 = arith.constant 5.000000e-01 : f32
    %58 = vector.broadcast %cst_26 : f32 to vector<8x256xf32>
    %59 = arith.addf %54, %58 : vector<8x256xf32>
    %60 = math.floor %59 : vector<8x256xf32>
    %61 = arith.subf %54, %60 : vector<8x256xf32>
    %cst_27 = arith.constant 2.000000e+00 : f32
    %62 = vector.broadcast %cst_27 : f32 to vector<8x256xf32>
    %63 = arith.mulf %62, %61 : vector<8x256xf32>
    %cst_28 = arith.constant 5.000000e-01 : f32
    %64 = vector.broadcast %cst_28 : f32 to vector<8x256xf32>
    %65 = arith.addf %63, %64 : vector<8x256xf32>
    %66 = math.floor %65 : vector<8x256xf32>
    %cst_29 = arith.constant 5.000000e-01 : f32
    %67 = vector.broadcast %cst_29 : f32 to vector<8x256xf32>
    %68 = arith.mulf %67, %66 : vector<8x256xf32>
    %69 = arith.subf %61, %68 : vector<8x256xf32>
    %70 = math.absf %66 : vector<8x256xf32>
    %cst_30 = arith.constant 2.000000e+00 : f32
    %71 = vector.broadcast %cst_30 : f32 to vector<8x256xf32>
    %72 = arith.mulf %71, %70 : vector<8x256xf32>
    %cst_31 = arith.constant 1.000000e+00 : f32
    %73 = vector.broadcast %cst_31 : f32 to vector<8x256xf32>
    %74 = arith.subf %73, %72 : vector<8x256xf32>
    %cst_32 = arith.constant 6.28318548 : f32
    %75 = vector.broadcast %cst_32 : f32 to vector<8x256xf32>
    %76 = arith.mulf %75, %69 : vector<8x256xf32>
    %77 = arith.mulf %76, %76 : vector<8x256xf32>
    %cst_33 = arith.constant -2.50521079E-8 : f32
    %78 = vector.broadcast %cst_33 : f32 to vector<8x256xf32>
    %79 = arith.mulf %77, %78 : vector<8x256xf32>
    %cst_34 = arith.constant 2.75573188E-6 : f32
    %80 = vector.broadcast %cst_34 : f32 to vector<8x256xf32>
    %81 = arith.addf %80, %79 : vector<8x256xf32>
    %82 = arith.mulf %77, %81 : vector<8x256xf32>
    %cst_35 = arith.constant -1.98412701E-4 : f32
    %83 = vector.broadcast %cst_35 : f32 to vector<8x256xf32>
    %84 = arith.addf %83, %82 : vector<8x256xf32>
    %85 = arith.mulf %77, %84 : vector<8x256xf32>
    %cst_36 = arith.constant 0.00833333377 : f32
    %86 = vector.broadcast %cst_36 : f32 to vector<8x256xf32>
    %87 = arith.addf %86, %85 : vector<8x256xf32>
    %88 = arith.mulf %77, %87 : vector<8x256xf32>
    %cst_37 = arith.constant -0.166666672 : f32
    %89 = vector.broadcast %cst_37 : f32 to vector<8x256xf32>
    %90 = arith.addf %89, %88 : vector<8x256xf32>
    %91 = arith.mulf %77, %90 : vector<8x256xf32>
    %cst_38 = arith.constant 1.000000e+00 : f32
    %92 = vector.broadcast %cst_38 : f32 to vector<8x256xf32>
    %93 = arith.addf %92, %91 : vector<8x256xf32>
    %94 = arith.mulf %76, %93 : vector<8x256xf32>
    %cst_39 = arith.constant -2.755732E-7 : f32
    %95 = vector.broadcast %cst_39 : f32 to vector<8x256xf32>
    %96 = arith.mulf %77, %95 : vector<8x256xf32>
    %cst_40 = arith.constant 2.48015876E-5 : f32
    %97 = vector.broadcast %cst_40 : f32 to vector<8x256xf32>
    %98 = arith.addf %97, %96 : vector<8x256xf32>
    %99 = arith.mulf %77, %98 : vector<8x256xf32>
    %cst_41 = arith.constant -0.00138888892 : f32
    %100 = vector.broadcast %cst_41 : f32 to vector<8x256xf32>
    %101 = arith.addf %100, %99 : vector<8x256xf32>
    %102 = arith.mulf %77, %101 : vector<8x256xf32>
    %cst_42 = arith.constant 0.0416666679 : f32
    %103 = vector.broadcast %cst_42 : f32 to vector<8x256xf32>
    %104 = arith.addf %103, %102 : vector<8x256xf32>
    %105 = arith.mulf %77, %104 : vector<8x256xf32>
    %cst_43 = arith.constant -5.000000e-01 : f32
    %106 = vector.broadcast %cst_43 : f32 to vector<8x256xf32>
    %107 = arith.addf %106, %105 : vector<8x256xf32>
    %108 = arith.mulf %77, %107 : vector<8x256xf32>
    %cst_44 = arith.constant 1.000000e+00 : f32
    %109 = vector.broadcast %cst_44 : f32 to vector<8x256xf32>
    %110 = arith.addf %109, %108 : vector<8x256xf32>
    %111 = arith.mulf %74, %110 : vector<8x256xf32>
    %112 = arith.mulf %74, %94 : vector<8x256xf32>
    %113 = arith.mulf %57, %111 : vector<8x256xf32>
    %c0_45 = arith.constant 0 : index
    %c0_46 = arith.constant 0 : index
    %c0_47 = arith.constant 0 : index
    %c0_48 = arith.constant 0 : index
    %114 = vector.load %arg8[%c0_45, %c0_46, %c0_47, %c0_48] : memref<2x3x8x256xf32, #tpu.memory_space<vmem>>, vector<1x1x8x256xf32>
    %115 = vector.shape_cast %114 : vector<1x1x8x256xf32> to vector<8x256xf32>
    %116 = vector.shape_cast %113 : vector<8x256xf32> to vector<1x1x8x256xf32>
    tpu.vector_store %arg8[%c0_45, %c0_46, %c0_47, %c0_48], %116 {strides = array<i32>} : memref<2x3x8x256xf32, #tpu.memory_space<vmem>>, vector<1x1x8x256xf32>,
    %117 = arith.mulf %57, %112 : vector<8x256xf32>
    %c0_49 = arith.constant 0 : index
    %c0_50 = arith.constant 0 : index
    %c0_51 = arith.constant 0 : index
    %c0_52 = arith.constant 0 : index
    %118 = vector.load %arg9[%c0_49, %c0_50, %c0_51, %c0_52] : memref<2x3x8x256xf32, #tpu.memory_space<vmem>>, vector<1x1x8x256xf32>
    %119 = vector.shape_cast %118 : vector<1x1x8x256xf32> to vector<8x256xf32>
    %120 = vector.shape_cast %117 : vector<8x256xf32> to vector<1x1x8x256xf32>
    tpu.vector_store %arg9[%c0_49, %c0_50, %c0_51, %c0_52], %120 {strides = array<i32>} : memref<2x3x8x256xf32, #tpu.memory_space<vmem>>, vector<1x1x8x256xf32>,
    %c1_53 = arith.constant 1 : index
    %c1_54 = arith.constant 1 : index
    %121 = memref.load %arg2[%c1_53, %c1_54] : memref<6x3xf32, #tpu.memory_space<smem>>
    %c1_55 = arith.constant 1 : index
    %c1_56 = arith.constant 1 : index
    %122 = memref.load %arg4[%c1_55, %c1_56] : memref<6x3xf32, #tpu.memory_space<smem>>
    %123 = vector.broadcast %121 : f32 to vector<8x256xf32>
    %124 = arith.mulf %123, %9 : vector<8x256xf32>
    %125 = vector.broadcast %122 : f32 to vector<8x256xf32>
    %126 = arith.mulf %125, %9 : vector<8x256xf32>
    %c2_57 = arith.constant 2 : index
    %c1_58 = arith.constant 1 : index
    %127 = memref.load %arg2[%c2_57, %c1_58] : memref<6x3xf32, #tpu.memory_space<smem>>
    %c2_59 = arith.constant 2 : index
    %c1_60 = arith.constant 1 : index
    %128 = memref.load %arg4[%c2_59, %c1_60] : memref<6x3xf32, #tpu.memory_space<smem>>
    %129 = vector.broadcast %127 : f32 to vector<8x256xf32>
    %130 = arith.mulf %129, %4 : vector<8x256xf32>
    %131 = arith.addf %124, %130 : vector<8x256xf32>
    %132 = vector.broadcast %128 : f32 to vector<8x256xf32>
    %133 = arith.mulf %132, %4 : vector<8x256xf32>
    %134 = arith.addf %126, %133 : vector<8x256xf32>
    %c3_61 = arith.constant 3 : index
    %c1_62 = arith.constant 1 : index
    %135 = memref.load %arg2[%c3_61, %c1_62] : memref<6x3xf32, #tpu.memory_space<smem>>
    %c3_63 = arith.constant 3 : index
    %c1_64 = arith.constant 1 : index
    %136 = memref.load %arg4[%c3_63, %c1_64] : memref<6x3xf32, #tpu.memory_space<smem>>
    %137 = vector.broadcast %135 : f32 to vector<8x256xf32>
    %138 = arith.mulf %137, %10 : vector<8x256xf32>
    %139 = arith.addf %131, %138 : vector<8x256xf32>
    %140 = vector.broadcast %136 : f32 to vector<8x256xf32>
    %141 = arith.mulf %140, %10 : vector<8x256xf32>
    %142 = arith.addf %134, %141 : vector<8x256xf32>
    %c4_65 = arith.constant 4 : index
    %c1_66 = arith.constant 1 : index
    %143 = memref.load %arg2[%c4_65, %c1_66] : memref<6x3xf32, #tpu.memory_space<smem>>
    %c4_67 = arith.constant 4 : index
    %c1_68 = arith.constant 1 : index
    %144 = memref.load %arg4[%c4_67, %c1_68] : memref<6x3xf32, #tpu.memory_space<smem>>
    %145 = vector.broadcast %143 : f32 to vector<8x256xf32>
    %146 = arith.mulf %145, %12 : vector<8x256xf32>
    %147 = arith.addf %139, %146 : vector<8x256xf32>
    %148 = vector.broadcast %144 : f32 to vector<8x256xf32>
    %149 = arith.mulf %148, %12 : vector<8x256xf32>
    %150 = arith.addf %142, %149 : vector<8x256xf32>
    %c5_69 = arith.constant 5 : index
    %c1_70 = arith.constant 1 : index
    %151 = memref.load %arg2[%c5_69, %c1_70] : memref<6x3xf32, #tpu.memory_space<smem>>
    %c5_71 = arith.constant 5 : index
    %c1_72 = arith.constant 1 : index
    %152 = memref.load %arg4[%c5_71, %c1_72] : memref<6x3xf32, #tpu.memory_space<smem>>
    %153 = vector.broadcast %151 : f32 to vector<8x256xf32>
    %154 = arith.mulf %153, %11 : vector<8x256xf32>
    %155 = arith.addf %147, %154 : vector<8x256xf32>
    %156 = vector.broadcast %152 : f32 to vector<8x256xf32>
    %157 = arith.mulf %156, %11 : vector<8x256xf32>
    %158 = arith.addf %150, %157 : vector<8x256xf32>
    %c0_73 = arith.constant 0 : index
    %c1_74 = arith.constant 1 : index
    %159 = memref.load %arg2[%c0_73, %c1_74] : memref<6x3xf32, #tpu.memory_space<smem>>
    %cst_75 = arith.constant 5.000000e-01 : f32
    %160 = arith.subf %159, %cst_75 : f32
    %161 = vector.broadcast %160 : f32 to vector<8x256xf32>
    %162 = arith.addf %155, %161 : vector<8x256xf32>
    %c0_76 = arith.constant 0 : index
    %c1_77 = arith.constant 1 : index
    %163 = memref.load %arg4[%c0_76, %c1_77] : memref<6x3xf32, #tpu.memory_space<smem>>
    %164 = vector.broadcast %163 : f32 to vector<8x256xf32>
    %165 = arith.addf %158, %164 : vector<8x256xf32>
    %cst_78 = arith.constant 5.000000e-01 : f32
    %166 = vector.broadcast %cst_78 : f32 to vector<8x256xf32>
    %167 = arith.addf %162, %166 : vector<8x256xf32>
    %168 = math.floor %167 : vector<8x256xf32>
    %169 = arith.subf %162, %168 : vector<8x256xf32>
    %cst_79 = arith.constant 2.000000e+00 : f32
    %170 = vector.broadcast %cst_79 : f32 to vector<8x256xf32>
    %171 = arith.mulf %170, %169 : vector<8x256xf32>
    %cst_80 = arith.constant 5.000000e-01 : f32
    %172 = vector.broadcast %cst_80 : f32 to vector<8x256xf32>
    %173 = arith.addf %171, %172 : vector<8x256xf32>
    %174 = math.floor %173 : vector<8x256xf32>
    %cst_81 = arith.constant 5.000000e-01 : f32
    %175 = vector.broadcast %cst_81 : f32 to vector<8x256xf32>
    %176 = arith.mulf %175, %174 : vector<8x256xf32>
    %177 = arith.subf %169, %176 : vector<8x256xf32>
    %178 = math.absf %174 : vector<8x256xf32>
    %cst_82 = arith.constant 2.000000e+00 : f32
    %179 = vector.broadcast %cst_82 : f32 to vector<8x256xf32>
    %180 = arith.mulf %179, %178 : vector<8x256xf32>
    %cst_83 = arith.constant 1.000000e+00 : f32
    %181 = vector.broadcast %cst_83 : f32 to vector<8x256xf32>
    %182 = arith.subf %181, %180 : vector<8x256xf32>
    %cst_84 = arith.constant 6.28318548 : f32
    %183 = vector.broadcast %cst_84 : f32 to vector<8x256xf32>
    %184 = arith.mulf %183, %177 : vector<8x256xf32>
    %185 = arith.mulf %184, %184 : vector<8x256xf32>
    %cst_85 = arith.constant -2.50521079E-8 : f32
    %186 = vector.broadcast %cst_85 : f32 to vector<8x256xf32>
    %187 = arith.mulf %185, %186 : vector<8x256xf32>
    %cst_86 = arith.constant 2.75573188E-6 : f32
    %188 = vector.broadcast %cst_86 : f32 to vector<8x256xf32>
    %189 = arith.addf %188, %187 : vector<8x256xf32>
    %190 = arith.mulf %185, %189 : vector<8x256xf32>
    %cst_87 = arith.constant -1.98412701E-4 : f32
    %191 = vector.broadcast %cst_87 : f32 to vector<8x256xf32>
    %192 = arith.addf %191, %190 : vector<8x256xf32>
    %193 = arith.mulf %185, %192 : vector<8x256xf32>
    %cst_88 = arith.constant 0.00833333377 : f32
    %194 = vector.broadcast %cst_88 : f32 to vector<8x256xf32>
    %195 = arith.addf %194, %193 : vector<8x256xf32>
    %196 = arith.mulf %185, %195 : vector<8x256xf32>
    %cst_89 = arith.constant -0.166666672 : f32
    %197 = vector.broadcast %cst_89 : f32 to vector<8x256xf32>
    %198 = arith.addf %197, %196 : vector<8x256xf32>
    %199 = arith.mulf %185, %198 : vector<8x256xf32>
    %cst_90 = arith.constant 1.000000e+00 : f32
    %200 = vector.broadcast %cst_90 : f32 to vector<8x256xf32>
    %201 = arith.addf %200, %199 : vector<8x256xf32>
    %202 = arith.mulf %184, %201 : vector<8x256xf32>
    %cst_91 = arith.constant -2.755732E-7 : f32
    %203 = vector.broadcast %cst_91 : f32 to vector<8x256xf32>
    %204 = arith.mulf %185, %203 : vector<8x256xf32>
    %cst_92 = arith.constant 2.48015876E-5 : f32
    %205 = vector.broadcast %cst_92 : f32 to vector<8x256xf32>
    %206 = arith.addf %205, %204 : vector<8x256xf32>
    %207 = arith.mulf %185, %206 : vector<8x256xf32>
    %cst_93 = arith.constant -0.00138888892 : f32
    %208 = vector.broadcast %cst_93 : f32 to vector<8x256xf32>
    %209 = arith.addf %208, %207 : vector<8x256xf32>
    %210 = arith.mulf %185, %209 : vector<8x256xf32>
    %cst_94 = arith.constant 0.0416666679 : f32
    %211 = vector.broadcast %cst_94 : f32 to vector<8x256xf32>
    %212 = arith.addf %211, %210 : vector<8x256xf32>
    %213 = arith.mulf %185, %212 : vector<8x256xf32>
    %cst_95 = arith.constant -5.000000e-01 : f32
    %214 = vector.broadcast %cst_95 : f32 to vector<8x256xf32>
    %215 = arith.addf %214, %213 : vector<8x256xf32>
    %216 = arith.mulf %185, %215 : vector<8x256xf32>
    %cst_96 = arith.constant 1.000000e+00 : f32
    %217 = vector.broadcast %cst_96 : f32 to vector<8x256xf32>
    %218 = arith.addf %217, %216 : vector<8x256xf32>
    %219 = arith.mulf %182, %218 : vector<8x256xf32>
    %220 = arith.mulf %182, %202 : vector<8x256xf32>
    %221 = arith.mulf %165, %219 : vector<8x256xf32>
    %c0_97 = arith.constant 0 : index
    %c1_98 = arith.constant 1 : index
    %c0_99 = arith.constant 0 : index
    %c0_100 = arith.constant 0 : index
    %222 = vector.load %arg8[%c0_97, %c1_98, %c0_99, %c0_100] : memref<2x3x8x256xf32, #tpu.memory_space<vmem>>, vector<1x1x8x256xf32>
    %223 = vector.shape_cast %222 : vector<1x1x8x256xf32> to vector<8x256xf32>
    %224 = vector.shape_cast %221 : vector<8x256xf32> to vector<1x1x8x256xf32>
    tpu.vector_store %arg8[%c0_97, %c1_98, %c0_99, %c0_100], %224 {strides = array<i32>} : memref<2x3x8x256xf32, #tpu.memory_space<vmem>>, vector<1x1x8x256xf32>,
    %225 = arith.mulf %165, %220 : vector<8x256xf32>
    %c0_101 = arith.constant 0 : index
    %c1_102 = arith.constant 1 : index
    %c0_103 = arith.constant 0 : index
    %c0_104 = arith.constant 0 : index
    %226 = vector.load %arg9[%c0_101, %c1_102, %c0_103, %c0_104] : memref<2x3x8x256xf32, #tpu.memory_space<vmem>>, vector<1x1x8x256xf32>
    %227 = vector.shape_cast %226 : vector<1x1x8x256xf32> to vector<8x256xf32>
    %228 = vector.shape_cast %225 : vector<8x256xf32> to vector<1x1x8x256xf32>
    tpu.vector_store %arg9[%c0_101, %c1_102, %c0_103, %c0_104], %228 {strides = array<i32>} : memref<2x3x8x256xf32, #tpu.memory_space<vmem>>, vector<1x1x8x256xf32>,
    %c1_105 = arith.constant 1 : index
    %c2_106 = arith.constant 2 : index
    %229 = memref.load %arg2[%c1_105, %c2_106] : memref<6x3xf32, #tpu.memory_space<smem>>
    %c1_107 = arith.constant 1 : index
    %c2_108 = arith.constant 2 : index
    %230 = memref.load %arg4[%c1_107, %c2_108] : memref<6x3xf32, #tpu.memory_space<smem>>
    %231 = vector.broadcast %229 : f32 to vector<8x256xf32>
    %232 = arith.mulf %231, %9 : vector<8x256xf32>
    %233 = vector.broadcast %230 : f32 to vector<8x256xf32>
    %234 = arith.mulf %233, %9 : vector<8x256xf32>
    %c2_109 = arith.constant 2 : index
    %c2_110 = arith.constant 2 : index
    %235 = memref.load %arg2[%c2_109, %c2_110] : memref<6x3xf32, #tpu.memory_space<smem>>
    %c2_111 = arith.constant 2 : index
    %c2_112 = arith.constant 2 : index
    %236 = memref.load %arg4[%c2_111, %c2_112] : memref<6x3xf32, #tpu.memory_space<smem>>
    %237 = vector.broadcast %235 : f32 to vector<8x256xf32>
    %238 = arith.mulf %237, %4 : vector<8x256xf32>
    %239 = arith.addf %232, %238 : vector<8x256xf32>
    %240 = vector.broadcast %236 : f32 to vector<8x256xf32>
    %241 = arith.mulf %240, %4 : vector<8x256xf32>
    %242 = arith.addf %234, %241 : vector<8x256xf32>
    %c3_113 = arith.constant 3 : index
    %c2_114 = arith.constant 2 : index
    %243 = memref.load %arg2[%c3_113, %c2_114] : memref<6x3xf32, #tpu.memory_space<smem>>
    %c3_115 = arith.constant 3 : index
    %c2_116 = arith.constant 2 : index
    %244 = memref.load %arg4[%c3_115, %c2_116] : memref<6x3xf32, #tpu.memory_space<smem>>
    %245 = vector.broadcast %243 : f32 to vector<8x256xf32>
    %246 = arith.mulf %245, %10 : vector<8x256xf32>
    %247 = arith.addf %239, %246 : vector<8x256xf32>
    %248 = vector.broadcast %244 : f32 to vector<8x256xf32>
    %249 = arith.mulf %248, %10 : vector<8x256xf32>
    %250 = arith.addf %242, %249 : vector<8x256xf32>
    %c4_117 = arith.constant 4 : index
    %c2_118 = arith.constant 2 : index
    %251 = memref.load %arg2[%c4_117, %c2_118] : memref<6x3xf32, #tpu.memory_space<smem>>
    %c4_119 = arith.constant 4 : index
    %c2_120 = arith.constant 2 : index
    %252 = memref.load %arg4[%c4_119, %c2_120] : memref<6x3xf32, #tpu.memory_space<smem>>
    %253 = vector.broadcast %251 : f32 to vector<8x256xf32>
    %254 = arith.mulf %253, %12 : vector<8x256xf32>
    %255 = arith.addf %247, %254 : vector<8x256xf32>
    %256 = vector.broadcast %252 : f32 to vector<8x256xf32>
    %257 = arith.mulf %256, %12 : vector<8x256xf32>
    %258 = arith.addf %250, %257 : vector<8x256xf32>
    %c5_121 = arith.constant 5 : index
    %c2_122 = arith.constant 2 : index
    %259 = memref.load %arg2[%c5_121, %c2_122] : memref<6x3xf32, #tpu.memory_space<smem>>
    %c5_123 = arith.constant 5 : index
    %c2_124 = arith.constant 2 : index
    %260 = memref.load %arg4[%c5_123, %c2_124] : memref<6x3xf32, #tpu.memory_space<smem>>
    %261 = vector.broadcast %259 : f32 to vector<8x256xf32>
    %262 = arith.mulf %261, %11 : vector<8x256xf32>
    %263 = arith.addf %255, %262 : vector<8x256xf32>
    %264 = vector.broadcast %260 : f32 to vector<8x256xf32>
    %265 = arith.mulf %264, %11 : vector<8x256xf32>
    %266 = arith.addf %258, %265 : vector<8x256xf32>
    %c0_125 = arith.constant 0 : index
    %c2_126 = arith.constant 2 : index
    %267 = memref.load %arg2[%c0_125, %c2_126] : memref<6x3xf32, #tpu.memory_space<smem>>
    %cst_127 = arith.constant 5.000000e-01 : f32
    %268 = arith.subf %267, %cst_127 : f32
    %269 = vector.broadcast %268 : f32 to vector<8x256xf32>
    %270 = arith.addf %263, %269 : vector<8x256xf32>
    %c0_128 = arith.constant 0 : index
    %c2_129 = arith.constant 2 : index
    %271 = memref.load %arg4[%c0_128, %c2_129] : memref<6x3xf32, #tpu.memory_space<smem>>
    %272 = vector.broadcast %271 : f32 to vector<8x256xf32>
    %273 = arith.addf %266, %272 : vector<8x256xf32>
    %cst_130 = arith.constant 5.000000e-01 : f32
    %274 = vector.broadcast %cst_130 : f32 to vector<8x256xf32>
    %275 = arith.addf %270, %274 : vector<8x256xf32>
    %276 = math.floor %275 : vector<8x256xf32>
    %277 = arith.subf %270, %276 : vector<8x256xf32>
    %cst_131 = arith.constant 2.000000e+00 : f32
    %278 = vector.broadcast %cst_131 : f32 to vector<8x256xf32>
    %279 = arith.mulf %278, %277 : vector<8x256xf32>
    %cst_132 = arith.constant 5.000000e-01 : f32
    %280 = vector.broadcast %cst_132 : f32 to vector<8x256xf32>
    %281 = arith.addf %279, %280 : vector<8x256xf32>
    %282 = math.floor %281 : vector<8x256xf32>
    %cst_133 = arith.constant 5.000000e-01 : f32
    %283 = vector.broadcast %cst_133 : f32 to vector<8x256xf32>
    %284 = arith.mulf %283, %282 : vector<8x256xf32>
    %285 = arith.subf %277, %284 : vector<8x256xf32>
    %286 = math.absf %282 : vector<8x256xf32>
    %cst_134 = arith.constant 2.000000e+00 : f32
    %287 = vector.broadcast %cst_134 : f32 to vector<8x256xf32>
    %288 = arith.mulf %287, %286 : vector<8x256xf32>
    %cst_135 = arith.constant 1.000000e+00 : f32
    %289 = vector.broadcast %cst_135 : f32 to vector<8x256xf32>
    %290 = arith.subf %289, %288 : vector<8x256xf32>
    %cst_136 = arith.constant 6.28318548 : f32
    %291 = vector.broadcast %cst_136 : f32 to vector<8x256xf32>
    %292 = arith.mulf %291, %285 : vector<8x256xf32>
    %293 = arith.mulf %292, %292 : vector<8x256xf32>
    %cst_137 = arith.constant -2.50521079E-8 : f32
    %294 = vector.broadcast %cst_137 : f32 to vector<8x256xf32>
    %295 = arith.mulf %293, %294 : vector<8x256xf32>
    %cst_138 = arith.constant 2.75573188E-6 : f32
    %296 = vector.broadcast %cst_138 : f32 to vector<8x256xf32>
    %297 = arith.addf %296, %295 : vector<8x256xf32>
    %298 = arith.mulf %293, %297 : vector<8x256xf32>
    %cst_139 = arith.constant -1.98412701E-4 : f32
    %299 = vector.broadcast %cst_139 : f32 to vector<8x256xf32>
    %300 = arith.addf %299, %298 : vector<8x256xf32>
    %301 = arith.mulf %293, %300 : vector<8x256xf32>
    %cst_140 = arith.constant 0.00833333377 : f32
    %302 = vector.broadcast %cst_140 : f32 to vector<8x256xf32>
    %303 = arith.addf %302, %301 : vector<8x256xf32>
    %304 = arith.mulf %293, %303 : vector<8x256xf32>
    %cst_141 = arith.constant -0.166666672 : f32
    %305 = vector.broadcast %cst_141 : f32 to vector<8x256xf32>
    %306 = arith.addf %305, %304 : vector<8x256xf32>
    %307 = arith.mulf %293, %306 : vector<8x256xf32>
    %cst_142 = arith.constant 1.000000e+00 : f32
    %308 = vector.broadcast %cst_142 : f32 to vector<8x256xf32>
    %309 = arith.addf %308, %307 : vector<8x256xf32>
    %310 = arith.mulf %292, %309 : vector<8x256xf32>
    %cst_143 = arith.constant -2.755732E-7 : f32
    %311 = vector.broadcast %cst_143 : f32 to vector<8x256xf32>
    %312 = arith.mulf %293, %311 : vector<8x256xf32>
    %cst_144 = arith.constant 2.48015876E-5 : f32
    %313 = vector.broadcast %cst_144 : f32 to vector<8x256xf32>
    %314 = arith.addf %313, %312 : vector<8x256xf32>
    %315 = arith.mulf %293, %314 : vector<8x256xf32>
    %cst_145 = arith.constant -0.00138888892 : f32
    %316 = vector.broadcast %cst_145 : f32 to vector<8x256xf32>
    %317 = arith.addf %316, %315 : vector<8x256xf32>
    %318 = arith.mulf %293, %317 : vector<8x256xf32>
    %cst_146 = arith.constant 0.0416666679 : f32
    %319 = vector.broadcast %cst_146 : f32 to vector<8x256xf32>
    %320 = arith.addf %319, %318 : vector<8x256xf32>
    %321 = arith.mulf %293, %320 : vector<8x256xf32>
    %cst_147 = arith.constant -5.000000e-01 : f32
    %322 = vector.broadcast %cst_147 : f32 to vector<8x256xf32>
    %323 = arith.addf %322, %321 : vector<8x256xf32>
    %324 = arith.mulf %293, %323 : vector<8x256xf32>
    %cst_148 = arith.constant 1.000000e+00 : f32
    %325 = vector.broadcast %cst_148 : f32 to vector<8x256xf32>
    %326 = arith.addf %325, %324 : vector<8x256xf32>
    %327 = arith.mulf %290, %326 : vector<8x256xf32>
    %328 = arith.mulf %290, %310 : vector<8x256xf32>
    %329 = arith.mulf %273, %327 : vector<8x256xf32>
    %c0_149 = arith.constant 0 : index
    %c2_150 = arith.constant 2 : index
    %c0_151 = arith.constant 0 : index
    %c0_152 = arith.constant 0 : index
    %330 = vector.load %arg8[%c0_149, %c2_150, %c0_151, %c0_152] : memref<2x3x8x256xf32, #tpu.memory_space<vmem>>, vector<1x1x8x256xf32>
    %331 = vector.shape_cast %330 : vector<1x1x8x256xf32> to vector<8x256xf32>
    %332 = vector.shape_cast %329 : vector<8x256xf32> to vector<1x1x8x256xf32>
    tpu.vector_store %arg8[%c0_149, %c2_150, %c0_151, %c0_152], %332 {strides = array<i32>} : memref<2x3x8x256xf32, #tpu.memory_space<vmem>>, vector<1x1x8x256xf32>,
    %333 = arith.mulf %273, %328 : vector<8x256xf32>
    %c0_153 = arith.constant 0 : index
    %c2_154 = arith.constant 2 : index
    %c0_155 = arith.constant 0 : index
    %c0_156 = arith.constant 0 : index
    %334 = vector.load %arg9[%c0_153, %c2_154, %c0_155, %c0_156] : memref<2x3x8x256xf32, #tpu.memory_space<vmem>>, vector<1x1x8x256xf32>
    %335 = vector.shape_cast %334 : vector<1x1x8x256xf32> to vector<8x256xf32>
    %336 = vector.shape_cast %333 : vector<8x256xf32> to vector<1x1x8x256xf32>
    tpu.vector_store %arg9[%c0_153, %c2_154, %c0_155, %c0_156], %336 {strides = array<i32>} : memref<2x3x8x256xf32, #tpu.memory_space<vmem>>, vector<1x1x8x256xf32>,
    %c1_157 = arith.constant 1 : index
    %c0_158 = arith.constant 0 : index
    %337 = memref.load %arg3[%c1_157, %c0_158] : memref<6x3xf32, #tpu.memory_space<smem>>
    %c1_159 = arith.constant 1 : index
    %c0_160 = arith.constant 0 : index
    %338 = memref.load %arg5[%c1_159, %c0_160] : memref<6x3xf32, #tpu.memory_space<smem>>
    %339 = vector.broadcast %337 : f32 to vector<8x256xf32>
    %340 = arith.mulf %339, %9 : vector<8x256xf32>
    %341 = vector.broadcast %338 : f32 to vector<8x256xf32>
    %342 = arith.mulf %341, %9 : vector<8x256xf32>
    %c2_161 = arith.constant 2 : index
    %c0_162 = arith.constant 0 : index
    %343 = memref.load %arg3[%c2_161, %c0_162] : memref<6x3xf32, #tpu.memory_space<smem>>
    %c2_163 = arith.constant 2 : index
    %c0_164 = arith.constant 0 : index
    %344 = memref.load %arg5[%c2_163, %c0_164] : memref<6x3xf32, #tpu.memory_space<smem>>
    %345 = vector.broadcast %343 : f32 to vector<8x256xf32>
    %346 = arith.mulf %345, %4 : vector<8x256xf32>
    %347 = arith.addf %340, %346 : vector<8x256xf32>
    %348 = vector.broadcast %344 : f32 to vector<8x256xf32>
    %349 = arith.mulf %348, %4 : vector<8x256xf32>
    %350 = arith.addf %342, %349 : vector<8x256xf32>
    %c3_165 = arith.constant 3 : index
    %c0_166 = arith.constant 0 : index
    %351 = memref.load %arg3[%c3_165, %c0_166] : memref<6x3xf32, #tpu.memory_space<smem>>
    %c3_167 = arith.constant 3 : index
    %c0_168 = arith.constant 0 : index
    %352 = memref.load %arg5[%c3_167, %c0_168] : memref<6x3xf32, #tpu.memory_space<smem>>
    %353 = vector.broadcast %351 : f32 to vector<8x256xf32>
    %354 = arith.mulf %353, %10 : vector<8x256xf32>
    %355 = arith.addf %347, %354 : vector<8x256xf32>
    %356 = vector.broadcast %352 : f32 to vector<8x256xf32>
    %357 = arith.mulf %356, %10 : vector<8x256xf32>
    %358 = arith.addf %350, %357 : vector<8x256xf32>
    %c4_169 = arith.constant 4 : index
    %c0_170 = arith.constant 0 : index
    %359 = memref.load %arg3[%c4_169, %c0_170] : memref<6x3xf32, #tpu.memory_space<smem>>
    %c4_171 = arith.constant 4 : index
    %c0_172 = arith.constant 0 : index
    %360 = memref.load %arg5[%c4_171, %c0_172] : memref<6x3xf32, #tpu.memory_space<smem>>
    %361 = vector.broadcast %359 : f32 to vector<8x256xf32>
    %362 = arith.mulf %361, %12 : vector<8x256xf32>
    %363 = arith.addf %355, %362 : vector<8x256xf32>
    %364 = vector.broadcast %360 : f32 to vector<8x256xf32>
    %365 = arith.mulf %364, %12 : vector<8x256xf32>
    %366 = arith.addf %358, %365 : vector<8x256xf32>
    %c5_173 = arith.constant 5 : index
    %c0_174 = arith.constant 0 : index
    %367 = memref.load %arg3[%c5_173, %c0_174] : memref<6x3xf32, #tpu.memory_space<smem>>
    %c5_175 = arith.constant 5 : index
    %c0_176 = arith.constant 0 : index
    %368 = memref.load %arg5[%c5_175, %c0_176] : memref<6x3xf32, #tpu.memory_space<smem>>
    %369 = vector.broadcast %367 : f32 to vector<8x256xf32>
    %370 = arith.mulf %369, %11 : vector<8x256xf32>
    %371 = arith.addf %363, %370 : vector<8x256xf32>
    %372 = vector.broadcast %368 : f32 to vector<8x256xf32>
    %373 = arith.mulf %372, %11 : vector<8x256xf32>
    %374 = arith.addf %366, %373 : vector<8x256xf32>
    %c0_177 = arith.constant 0 : index
    %c0_178 = arith.constant 0 : index
    %375 = memref.load %arg3[%c0_177, %c0_178] : memref<6x3xf32, #tpu.memory_space<smem>>
    %cst_179 = arith.constant 5.000000e-01 : f32
    %376 = arith.subf %375, %cst_179 : f32
    %377 = vector.broadcast %376 : f32 to vector<8x256xf32>
    %378 = arith.addf %371, %377 : vector<8x256xf32>
    %c0_180 = arith.constant 0 : index
    %c0_181 = arith.constant 0 : index
    %379 = memref.load %arg5[%c0_180, %c0_181] : memref<6x3xf32, #tpu.memory_space<smem>>
    %380 = vector.broadcast %379 : f32 to vector<8x256xf32>
    %381 = arith.addf %374, %380 : vector<8x256xf32>
    %cst_182 = arith.constant 5.000000e-01 : f32
    %382 = vector.broadcast %cst_182 : f32 to vector<8x256xf32>
    %383 = arith.addf %378, %382 : vector<8x256xf32>
    %384 = math.floor %383 : vector<8x256xf32>
    %385 = arith.subf %378, %384 : vector<8x256xf32>
    %cst_183 = arith.constant 2.000000e+00 : f32
    %386 = vector.broadcast %cst_183 : f32 to vector<8x256xf32>
    %387 = arith.mulf %386, %385 : vector<8x256xf32>
    %cst_184 = arith.constant 5.000000e-01 : f32
    %388 = vector.broadcast %cst_184 : f32 to vector<8x256xf32>
    %389 = arith.addf %387, %388 : vector<8x256xf32>
    %390 = math.floor %389 : vector<8x256xf32>
    %cst_185 = arith.constant 5.000000e-01 : f32
    %391 = vector.broadcast %cst_185 : f32 to vector<8x256xf32>
    %392 = arith.mulf %391, %390 : vector<8x256xf32>
    %393 = arith.subf %385, %392 : vector<8x256xf32>
    %394 = math.absf %390 : vector<8x256xf32>
    %cst_186 = arith.constant 2.000000e+00 : f32
    %395 = vector.broadcast %cst_186 : f32 to vector<8x256xf32>
    %396 = arith.mulf %395, %394 : vector<8x256xf32>
    %cst_187 = arith.constant 1.000000e+00 : f32
    %397 = vector.broadcast %cst_187 : f32 to vector<8x256xf32>
    %398 = arith.subf %397, %396 : vector<8x256xf32>
    %cst_188 = arith.constant 6.28318548 : f32
    %399 = vector.broadcast %cst_188 : f32 to vector<8x256xf32>
    %400 = arith.mulf %399, %393 : vector<8x256xf32>
    %401 = arith.mulf %400, %400 : vector<8x256xf32>
    %cst_189 = arith.constant -2.50521079E-8 : f32
    %402 = vector.broadcast %cst_189 : f32 to vector<8x256xf32>
    %403 = arith.mulf %401, %402 : vector<8x256xf32>
    %cst_190 = arith.constant 2.75573188E-6 : f32
    %404 = vector.broadcast %cst_190 : f32 to vector<8x256xf32>
    %405 = arith.addf %404, %403 : vector<8x256xf32>
    %406 = arith.mulf %401, %405 : vector<8x256xf32>
    %cst_191 = arith.constant -1.98412701E-4 : f32
    %407 = vector.broadcast %cst_191 : f32 to vector<8x256xf32>
    %408 = arith.addf %407, %406 : vector<8x256xf32>
    %409 = arith.mulf %401, %408 : vector<8x256xf32>
    %cst_192 = arith.constant 0.00833333377 : f32
    %410 = vector.broadcast %cst_192 : f32 to vector<8x256xf32>
    %411 = arith.addf %410, %409 : vector<8x256xf32>
    %412 = arith.mulf %401, %411 : vector<8x256xf32>
    %cst_193 = arith.constant -0.166666672 : f32
    %413 = vector.broadcast %cst_193 : f32 to vector<8x256xf32>
    %414 = arith.addf %413, %412 : vector<8x256xf32>
    %415 = arith.mulf %401, %414 : vector<8x256xf32>
    %cst_194 = arith.constant 1.000000e+00 : f32
    %416 = vector.broadcast %cst_194 : f32 to vector<8x256xf32>
    %417 = arith.addf %416, %415 : vector<8x256xf32>
    %418 = arith.mulf %400, %417 : vector<8x256xf32>
    %cst_195 = arith.constant -2.755732E-7 : f32
    %419 = vector.broadcast %cst_195 : f32 to vector<8x256xf32>
    %420 = arith.mulf %401, %419 : vector<8x256xf32>
    %cst_196 = arith.constant 2.48015876E-5 : f32
    %421 = vector.broadcast %cst_196 : f32 to vector<8x256xf32>
    %422 = arith.addf %421, %420 : vector<8x256xf32>
    %423 = arith.mulf %401, %422 : vector<8x256xf32>
    %cst_197 = arith.constant -0.00138888892 : f32
    %424 = vector.broadcast %cst_197 : f32 to vector<8x256xf32>
    %425 = arith.addf %424, %423 : vector<8x256xf32>
    %426 = arith.mulf %401, %425 : vector<8x256xf32>
    %cst_198 = arith.constant 0.0416666679 : f32
    %427 = vector.broadcast %cst_198 : f32 to vector<8x256xf32>
    %428 = arith.addf %427, %426 : vector<8x256xf32>
    %429 = arith.mulf %401, %428 : vector<8x256xf32>
    %cst_199 = arith.constant -5.000000e-01 : f32
    %430 = vector.broadcast %cst_199 : f32 to vector<8x256xf32>
    %431 = arith.addf %430, %429 : vector<8x256xf32>
    %432 = arith.mulf %401, %431 : vector<8x256xf32>
    %cst_200 = arith.constant 1.000000e+00 : f32
    %433 = vector.broadcast %cst_200 : f32 to vector<8x256xf32>
    %434 = arith.addf %433, %432 : vector<8x256xf32>
    %435 = arith.mulf %398, %434 : vector<8x256xf32>
    %436 = arith.mulf %398, %418 : vector<8x256xf32>
    %437 = arith.mulf %381, %435 : vector<8x256xf32>
    %c1_201 = arith.constant 1 : index
    %c0_202 = arith.constant 0 : index
    %c0_203 = arith.constant 0 : index
    %c0_204 = arith.constant 0 : index
    %438 = vector.load %arg8[%c1_201, %c0_202, %c0_203, %c0_204] : memref<2x3x8x256xf32, #tpu.memory_space<vmem>>, vector<1x1x8x256xf32>
    %439 = vector.shape_cast %438 : vector<1x1x8x256xf32> to vector<8x256xf32>
    %440 = vector.shape_cast %437 : vector<8x256xf32> to vector<1x1x8x256xf32>
    tpu.vector_store %arg8[%c1_201, %c0_202, %c0_203, %c0_204], %440 {strides = array<i32>} : memref<2x3x8x256xf32, #tpu.memory_space<vmem>>, vector<1x1x8x256xf32>,
    %441 = arith.mulf %381, %436 : vector<8x256xf32>
    %c1_205 = arith.constant 1 : index
    %c0_206 = arith.constant 0 : index
    %c0_207 = arith.constant 0 : index
    %c0_208 = arith.constant 0 : index
    %442 = vector.load %arg9[%c1_205, %c0_206, %c0_207, %c0_208] : memref<2x3x8x256xf32, #tpu.memory_space<vmem>>, vector<1x1x8x256xf32>
    %443 = vector.shape_cast %442 : vector<1x1x8x256xf32> to vector<8x256xf32>
    %444 = vector.shape_cast %441 : vector<8x256xf32> to vector<1x1x8x256xf32>
    tpu.vector_store %arg9[%c1_205, %c0_206, %c0_207, %c0_208], %444 {strides = array<i32>} : memref<2x3x8x256xf32, #tpu.memory_space<vmem>>, vector<1x1x8x256xf32>,
    %c1_209 = arith.constant 1 : index
    %c1_210 = arith.constant 1 : index
    %445 = memref.load %arg3[%c1_209, %c1_210] : memref<6x3xf32, #tpu.memory_space<smem>>
    %c1_211 = arith.constant 1 : index
    %c1_212 = arith.constant 1 : index
    %446 = memref.load %arg5[%c1_211, %c1_212] : memref<6x3xf32, #tpu.memory_space<smem>>
    %447 = vector.broadcast %445 : f32 to vector<8x256xf32>
    %448 = arith.mulf %447, %9 : vector<8x256xf32>
    %449 = vector.broadcast %446 : f32 to vector<8x256xf32>
    %450 = arith.mulf %449, %9 : vector<8x256xf32>
    %c2_213 = arith.constant 2 : index
    %c1_214 = arith.constant 1 : index
    %451 = memref.load %arg3[%c2_213, %c1_214] : memref<6x3xf32, #tpu.memory_space<smem>>
    %c2_215 = arith.constant 2 : index
    %c1_216 = arith.constant 1 : index
    %452 = memref.load %arg5[%c2_215, %c1_216] : memref<6x3xf32, #tpu.memory_space<smem>>
    %453 = vector.broadcast %451 : f32 to vector<8x256xf32>
    %454 = arith.mulf %453, %4 : vector<8x256xf32>
    %455 = arith.addf %448, %454 : vector<8x256xf32>
    %456 = vector.broadcast %452 : f32 to vector<8x256xf32>
    %457 = arith.mulf %456, %4 : vector<8x256xf32>
    %458 = arith.addf %450, %457 : vector<8x256xf32>
    %c3_217 = arith.constant 3 : index
    %c1_218 = arith.constant 1 : index
    %459 = memref.load %arg3[%c3_217, %c1_218] : memref<6x3xf32, #tpu.memory_space<smem>>
    %c3_219 = arith.constant 3 : index
    %c1_220 = arith.constant 1 : index
    %460 = memref.load %arg5[%c3_219, %c1_220] : memref<6x3xf32, #tpu.memory_space<smem>>
    %461 = vector.broadcast %459 : f32 to vector<8x256xf32>
    %462 = arith.mulf %461, %10 : vector<8x256xf32>
    %463 = arith.addf %455, %462 : vector<8x256xf32>
    %464 = vector.broadcast %460 : f32 to vector<8x256xf32>
    %465 = arith.mulf %464, %10 : vector<8x256xf32>
    %466 = arith.addf %458, %465 : vector<8x256xf32>
    %c4_221 = arith.constant 4 : index
    %c1_222 = arith.constant 1 : index
    %467 = memref.load %arg3[%c4_221, %c1_222] : memref<6x3xf32, #tpu.memory_space<smem>>
    %c4_223 = arith.constant 4 : index
    %c1_224 = arith.constant 1 : index
    %468 = memref.load %arg5[%c4_223, %c1_224] : memref<6x3xf32, #tpu.memory_space<smem>>
    %469 = vector.broadcast %467 : f32 to vector<8x256xf32>
    %470 = arith.mulf %469, %12 : vector<8x256xf32>
    %471 = arith.addf %463, %470 : vector<8x256xf32>
    %472 = vector.broadcast %468 : f32 to vector<8x256xf32>
    %473 = arith.mulf %472, %12 : vector<8x256xf32>
    %474 = arith.addf %466, %473 : vector<8x256xf32>
    %c5_225 = arith.constant 5 : index
    %c1_226 = arith.constant 1 : index
    %475 = memref.load %arg3[%c5_225, %c1_226] : memref<6x3xf32, #tpu.memory_space<smem>>
    %c5_227 = arith.constant 5 : index
    %c1_228 = arith.constant 1 : index
    %476 = memref.load %arg5[%c5_227, %c1_228] : memref<6x3xf32, #tpu.memory_space<smem>>
    %477 = vector.broadcast %475 : f32 to vector<8x256xf32>
    %478 = arith.mulf %477, %11 : vector<8x256xf32>
    %479 = arith.addf %471, %478 : vector<8x256xf32>
    %480 = vector.broadcast %476 : f32 to vector<8x256xf32>
    %481 = arith.mulf %480, %11 : vector<8x256xf32>
    %482 = arith.addf %474, %481 : vector<8x256xf32>
    %c0_229 = arith.constant 0 : index
    %c1_230 = arith.constant 1 : index
    %483 = memref.load %arg3[%c0_229, %c1_230] : memref<6x3xf32, #tpu.memory_space<smem>>
    %cst_231 = arith.constant 5.000000e-01 : f32
    %484 = arith.subf %483, %cst_231 : f32
    %485 = vector.broadcast %484 : f32 to vector<8x256xf32>
    %486 = arith.addf %479, %485 : vector<8x256xf32>
    %c0_232 = arith.constant 0 : index
    %c1_233 = arith.constant 1 : index
    %487 = memref.load %arg5[%c0_232, %c1_233] : memref<6x3xf32, #tpu.memory_space<smem>>
    %488 = vector.broadcast %487 : f32 to vector<8x256xf32>
    %489 = arith.addf %482, %488 : vector<8x256xf32>
    %cst_234 = arith.constant 5.000000e-01 : f32
    %490 = vector.broadcast %cst_234 : f32 to vector<8x256xf32>
    %491 = arith.addf %486, %490 : vector<8x256xf32>
    %492 = math.floor %491 : vector<8x256xf32>
    %493 = arith.subf %486, %492 : vector<8x256xf32>
    %cst_235 = arith.constant 2.000000e+00 : f32
    %494 = vector.broadcast %cst_235 : f32 to vector<8x256xf32>
    %495 = arith.mulf %494, %493 : vector<8x256xf32>
    %cst_236 = arith.constant 5.000000e-01 : f32
    %496 = vector.broadcast %cst_236 : f32 to vector<8x256xf32>
    %497 = arith.addf %495, %496 : vector<8x256xf32>
    %498 = math.floor %497 : vector<8x256xf32>
    %cst_237 = arith.constant 5.000000e-01 : f32
    %499 = vector.broadcast %cst_237 : f32 to vector<8x256xf32>
    %500 = arith.mulf %499, %498 : vector<8x256xf32>
    %501 = arith.subf %493, %500 : vector<8x256xf32>
    %502 = math.absf %498 : vector<8x256xf32>
    %cst_238 = arith.constant 2.000000e+00 : f32
    %503 = vector.broadcast %cst_238 : f32 to vector<8x256xf32>
    %504 = arith.mulf %503, %502 : vector<8x256xf32>
    %cst_239 = arith.constant 1.000000e+00 : f32
    %505 = vector.broadcast %cst_239 : f32 to vector<8x256xf32>
    %506 = arith.subf %505, %504 : vector<8x256xf32>
    %cst_240 = arith.constant 6.28318548 : f32
    %507 = vector.broadcast %cst_240 : f32 to vector<8x256xf32>
    %508 = arith.mulf %507, %501 : vector<8x256xf32>
    %509 = arith.mulf %508, %508 : vector<8x256xf32>
    %cst_241 = arith.constant -2.50521079E-8 : f32
    %510 = vector.broadcast %cst_241 : f32 to vector<8x256xf32>
    %511 = arith.mulf %509, %510 : vector<8x256xf32>
    %cst_242 = arith.constant 2.75573188E-6 : f32
    %512 = vector.broadcast %cst_242 : f32 to vector<8x256xf32>
    %513 = arith.addf %512, %511 : vector<8x256xf32>
    %514 = arith.mulf %509, %513 : vector<8x256xf32>
    %cst_243 = arith.constant -1.98412701E-4 : f32
    %515 = vector.broadcast %cst_243 : f32 to vector<8x256xf32>
    %516 = arith.addf %515, %514 : vector<8x256xf32>
    %517 = arith.mulf %509, %516 : vector<8x256xf32>
    %cst_244 = arith.constant 0.00833333377 : f32
    %518 = vector.broadcast %cst_244 : f32 to vector<8x256xf32>
    %519 = arith.addf %518, %517 : vector<8x256xf32>
    %520 = arith.mulf %509, %519 : vector<8x256xf32>
    %cst_245 = arith.constant -0.166666672 : f32
    %521 = vector.broadcast %cst_245 : f32 to vector<8x256xf32>
    %522 = arith.addf %521, %520 : vector<8x256xf32>
    %523 = arith.mulf %509, %522 : vector<8x256xf32>
    %cst_246 = arith.constant 1.000000e+00 : f32
    %524 = vector.broadcast %cst_246 : f32 to vector<8x256xf32>
    %525 = arith.addf %524, %523 : vector<8x256xf32>
    %526 = arith.mulf %508, %525 : vector<8x256xf32>
    %cst_247 = arith.constant -2.755732E-7 : f32
    %527 = vector.broadcast %cst_247 : f32 to vector<8x256xf32>
    %528 = arith.mulf %509, %527 : vector<8x256xf32>
    %cst_248 = arith.constant 2.48015876E-5 : f32
    %529 = vector.broadcast %cst_248 : f32 to vector<8x256xf32>
    %530 = arith.addf %529, %528 : vector<8x256xf32>
    %531 = arith.mulf %509, %530 : vector<8x256xf32>
    %cst_249 = arith.constant -0.00138888892 : f32
    %532 = vector.broadcast %cst_249 : f32 to vector<8x256xf32>
    %533 = arith.addf %532, %531 : vector<8x256xf32>
    %534 = arith.mulf %509, %533 : vector<8x256xf32>
    %cst_250 = arith.constant 0.0416666679 : f32
    %535 = vector.broadcast %cst_250 : f32 to vector<8x256xf32>
    %536 = arith.addf %535, %534 : vector<8x256xf32>
    %537 = arith.mulf %509, %536 : vector<8x256xf32>
    %cst_251 = arith.constant -5.000000e-01 : f32
    %538 = vector.broadcast %cst_251 : f32 to vector<8x256xf32>
    %539 = arith.addf %538, %537 : vector<8x256xf32>
    %540 = arith.mulf %509, %539 : vector<8x256xf32>
    %cst_252 = arith.constant 1.000000e+00 : f32
    %541 = vector.broadcast %cst_252 : f32 to vector<8x256xf32>
    %542 = arith.addf %541, %540 : vector<8x256xf32>
    %543 = arith.mulf %506, %542 : vector<8x256xf32>
    %544 = arith.mulf %506, %526 : vector<8x256xf32>
    %545 = arith.mulf %489, %543 : vector<8x256xf32>
    %c1_253 = arith.constant 1 : index
    %c1_254 = arith.constant 1 : index
    %c0_255 = arith.constant 0 : index
    %c0_256 = arith.constant 0 : index
    %546 = vector.load %arg8[%c1_253, %c1_254, %c0_255, %c0_256] : memref<2x3x8x256xf32, #tpu.memory_space<vmem>>, vector<1x1x8x256xf32>
    %547 = vector.shape_cast %546 : vector<1x1x8x256xf32> to vector<8x256xf32>
    %548 = vector.shape_cast %545 : vector<8x256xf32> to vector<1x1x8x256xf32>
    tpu.vector_store %arg8[%c1_253, %c1_254, %c0_255, %c0_256], %548 {strides = array<i32>} : memref<2x3x8x256xf32, #tpu.memory_space<vmem>>, vector<1x1x8x256xf32>,
    %549 = arith.mulf %489, %544 : vector<8x256xf32>
    %c1_257 = arith.constant 1 : index
    %c1_258 = arith.constant 1 : index
    %c0_259 = arith.constant 0 : index
    %c0_260 = arith.constant 0 : index
    %550 = vector.load %arg9[%c1_257, %c1_258, %c0_259, %c0_260] : memref<2x3x8x256xf32, #tpu.memory_space<vmem>>, vector<1x1x8x256xf32>
    %551 = vector.shape_cast %550 : vector<1x1x8x256xf32> to vector<8x256xf32>
    %552 = vector.shape_cast %549 : vector<8x256xf32> to vector<1x1x8x256xf32>
    tpu.vector_store %arg9[%c1_257, %c1_258, %c0_259, %c0_260], %552 {strides = array<i32>} : memref<2x3x8x256xf32, #tpu.memory_space<vmem>>, vector<1x1x8x256xf32>,
    %c1_261 = arith.constant 1 : index
    %c2_262 = arith.constant 2 : index
    %553 = memref.load %arg3[%c1_261, %c2_262] : memref<6x3xf32, #tpu.memory_space<smem>>
    %c1_263 = arith.constant 1 : index
    %c2_264 = arith.constant 2 : index
    %554 = memref.load %arg5[%c1_263, %c2_264] : memref<6x3xf32, #tpu.memory_space<smem>>
    %555 = vector.broadcast %553 : f32 to vector<8x256xf32>
    %556 = arith.mulf %555, %9 : vector<8x256xf32>
    %557 = vector.broadcast %554 : f32 to vector<8x256xf32>
    %558 = arith.mulf %557, %9 : vector<8x256xf32>
    %c2_265 = arith.constant 2 : index
    %c2_266 = arith.constant 2 : index
    %559 = memref.load %arg3[%c2_265, %c2_266] : memref<6x3xf32, #tpu.memory_space<smem>>
    %c2_267 = arith.constant 2 : index
    %c2_268 = arith.constant 2 : index
    %560 = memref.load %arg5[%c2_267, %c2_268] : memref<6x3xf32, #tpu.memory_space<smem>>
    %561 = vector.broadcast %559 : f32 to vector<8x256xf32>
    %562 = arith.mulf %561, %4 : vector<8x256xf32>
    %563 = arith.addf %556, %562 : vector<8x256xf32>
    %564 = vector.broadcast %560 : f32 to vector<8x256xf32>
    %565 = arith.mulf %564, %4 : vector<8x256xf32>
    %566 = arith.addf %558, %565 : vector<8x256xf32>
    %c3_269 = arith.constant 3 : index
    %c2_270 = arith.constant 2 : index
    %567 = memref.load %arg3[%c3_269, %c2_270] : memref<6x3xf32, #tpu.memory_space<smem>>
    %c3_271 = arith.constant 3 : index
    %c2_272 = arith.constant 2 : index
    %568 = memref.load %arg5[%c3_271, %c2_272] : memref<6x3xf32, #tpu.memory_space<smem>>
    %569 = vector.broadcast %567 : f32 to vector<8x256xf32>
    %570 = arith.mulf %569, %10 : vector<8x256xf32>
    %571 = arith.addf %563, %570 : vector<8x256xf32>
    %572 = vector.broadcast %568 : f32 to vector<8x256xf32>
    %573 = arith.mulf %572, %10 : vector<8x256xf32>
    %574 = arith.addf %566, %573 : vector<8x256xf32>
    %c4_273 = arith.constant 4 : index
    %c2_274 = arith.constant 2 : index
    %575 = memref.load %arg3[%c4_273, %c2_274] : memref<6x3xf32, #tpu.memory_space<smem>>
    %c4_275 = arith.constant 4 : index
    %c2_276 = arith.constant 2 : index
    %576 = memref.load %arg5[%c4_275, %c2_276] : memref<6x3xf32, #tpu.memory_space<smem>>
    %577 = vector.broadcast %575 : f32 to vector<8x256xf32>
    %578 = arith.mulf %577, %12 : vector<8x256xf32>
    %579 = arith.addf %571, %578 : vector<8x256xf32>
    %580 = vector.broadcast %576 : f32 to vector<8x256xf32>
    %581 = arith.mulf %580, %12 : vector<8x256xf32>
    %582 = arith.addf %574, %581 : vector<8x256xf32>
    %c5_277 = arith.constant 5 : index
    %c2_278 = arith.constant 2 : index
    %583 = memref.load %arg3[%c5_277, %c2_278] : memref<6x3xf32, #tpu.memory_space<smem>>
    %c5_279 = arith.constant 5 : index
    %c2_280 = arith.constant 2 : index
    %584 = memref.load %arg5[%c5_279, %c2_280] : memref<6x3xf32, #tpu.memory_space<smem>>
    %585 = vector.broadcast %583 : f32 to vector<8x256xf32>
    %586 = arith.mulf %585, %11 : vector<8x256xf32>
    %587 = arith.addf %579, %586 : vector<8x256xf32>
    %588 = vector.broadcast %584 : f32 to vector<8x256xf32>
    %589 = arith.mulf %588, %11 : vector<8x256xf32>
    %590 = arith.addf %582, %589 : vector<8x256xf32>
    %c0_281 = arith.constant 0 : index
    %c2_282 = arith.constant 2 : index
    %591 = memref.load %arg3[%c0_281, %c2_282] : memref<6x3xf32, #tpu.memory_space<smem>>
    %cst_283 = arith.constant 5.000000e-01 : f32
    %592 = arith.subf %591, %cst_283 : f32
    %593 = vector.broadcast %592 : f32 to vector<8x256xf32>
    %594 = arith.addf %587, %593 : vector<8x256xf32>
    %c0_284 = arith.constant 0 : index
    %c2_285 = arith.constant 2 : index
    %595 = memref.load %arg5[%c0_284, %c2_285] : memref<6x3xf32, #tpu.memory_space<smem>>
    %596 = vector.broadcast %595 : f32 to vector<8x256xf32>
    %597 = arith.addf %590, %596 : vector<8x256xf32>
    %cst_286 = arith.constant 5.000000e-01 : f32
    %598 = vector.broadcast %cst_286 : f32 to vector<8x256xf32>
    %599 = arith.addf %594, %598 : vector<8x256xf32>
    %600 = math.floor %599 : vector<8x256xf32>
    %601 = arith.subf %594, %600 : vector<8x256xf32>
    %cst_287 = arith.constant 2.000000e+00 : f32
    %602 = vector.broadcast %cst_287 : f32 to vector<8x256xf32>
    %603 = arith.mulf %602, %601 : vector<8x256xf32>
    %cst_288 = arith.constant 5.000000e-01 : f32
    %604 = vector.broadcast %cst_288 : f32 to vector<8x256xf32>
    %605 = arith.addf %603, %604 : vector<8x256xf32>
    %606 = math.floor %605 : vector<8x256xf32>
    %cst_289 = arith.constant 5.000000e-01 : f32
    %607 = vector.broadcast %cst_289 : f32 to vector<8x256xf32>
    %608 = arith.mulf %607, %606 : vector<8x256xf32>
    %609 = arith.subf %601, %608 : vector<8x256xf32>
    %610 = math.absf %606 : vector<8x256xf32>
    %cst_290 = arith.constant 2.000000e+00 : f32
    %611 = vector.broadcast %cst_290 : f32 to vector<8x256xf32>
    %612 = arith.mulf %611, %610 : vector<8x256xf32>
    %cst_291 = arith.constant 1.000000e+00 : f32
    %613 = vector.broadcast %cst_291 : f32 to vector<8x256xf32>
    %614 = arith.subf %613, %612 : vector<8x256xf32>
    %cst_292 = arith.constant 6.28318548 : f32
    %615 = vector.broadcast %cst_292 : f32 to vector<8x256xf32>
    %616 = arith.mulf %615, %609 : vector<8x256xf32>
    %617 = arith.mulf %616, %616 : vector<8x256xf32>
    %cst_293 = arith.constant -2.50521079E-8 : f32
    %618 = vector.broadcast %cst_293 : f32 to vector<8x256xf32>
    %619 = arith.mulf %617, %618 : vector<8x256xf32>
    %cst_294 = arith.constant 2.75573188E-6 : f32
    %620 = vector.broadcast %cst_294 : f32 to vector<8x256xf32>
    %621 = arith.addf %620, %619 : vector<8x256xf32>
    %622 = arith.mulf %617, %621 : vector<8x256xf32>
    %cst_295 = arith.constant -1.98412701E-4 : f32
    %623 = vector.broadcast %cst_295 : f32 to vector<8x256xf32>
    %624 = arith.addf %623, %622 : vector<8x256xf32>
    %625 = arith.mulf %617, %624 : vector<8x256xf32>
    %cst_296 = arith.constant 0.00833333377 : f32
    %626 = vector.broadcast %cst_296 : f32 to vector<8x256xf32>
    %627 = arith.addf %626, %625 : vector<8x256xf32>
    %628 = arith.mulf %617, %627 : vector<8x256xf32>
    %cst_297 = arith.constant -0.166666672 : f32
    %629 = vector.broadcast %cst_297 : f32 to vector<8x256xf32>
    %630 = arith.addf %629, %628 : vector<8x256xf32>
    %631 = arith.mulf %617, %630 : vector<8x256xf32>
    %cst_298 = arith.constant 1.000000e+00 : f32
    %632 = vector.broadcast %cst_298 : f32 to vector<8x256xf32>
    %633 = arith.addf %632, %631 : vector<8x256xf32>
    %634 = arith.mulf %616, %633 : vector<8x256xf32>
    %cst_299 = arith.constant -2.755732E-7 : f32
    %635 = vector.broadcast %cst_299 : f32 to vector<8x256xf32>
    %636 = arith.mulf %617, %635 : vector<8x256xf32>
    %cst_300 = arith.constant 2.48015876E-5 : f32
    %637 = vector.broadcast %cst_300 : f32 to vector<8x256xf32>
    %638 = arith.addf %637, %636 : vector<8x256xf32>
    %639 = arith.mulf %617, %638 : vector<8x256xf32>
    %cst_301 = arith.constant -0.00138888892 : f32
    %640 = vector.broadcast %cst_301 : f32 to vector<8x256xf32>
    %641 = arith.addf %640, %639 : vector<8x256xf32>
    %642 = arith.mulf %617, %641 : vector<8x256xf32>
    %cst_302 = arith.constant 0.0416666679 : f32
    %643 = vector.broadcast %cst_302 : f32 to vector<8x256xf32>
    %644 = arith.addf %643, %642 : vector<8x256xf32>
    %645 = arith.mulf %617, %644 : vector<8x256xf32>
    %cst_303 = arith.constant -5.000000e-01 : f32
    %646 = vector.broadcast %cst_303 : f32 to vector<8x256xf32>
    %647 = arith.addf %646, %645 : vector<8x256xf32>
    %648 = arith.mulf %617, %647 : vector<8x256xf32>
    %cst_304 = arith.constant 1.000000e+00 : f32
    %649 = vector.broadcast %cst_304 : f32 to vector<8x256xf32>
    %650 = arith.addf %649, %648 : vector<8x256xf32>
    %651 = arith.mulf %614, %650 : vector<8x256xf32>
    %652 = arith.mulf %614, %634 : vector<8x256xf32>
    %653 = arith.mulf %597, %651 : vector<8x256xf32>
    %c1_305 = arith.constant 1 : index
    %c2_306 = arith.constant 2 : index
    %c0_307 = arith.constant 0 : index
    %c0_308 = arith.constant 0 : index
    %654 = vector.load %arg8[%c1_305, %c2_306, %c0_307, %c0_308] : memref<2x3x8x256xf32, #tpu.memory_space<vmem>>, vector<1x1x8x256xf32>
    %655 = vector.shape_cast %654 : vector<1x1x8x256xf32> to vector<8x256xf32>
    %656 = vector.shape_cast %653 : vector<8x256xf32> to vector<1x1x8x256xf32>
    tpu.vector_store %arg8[%c1_305, %c2_306, %c0_307, %c0_308], %656 {strides = array<i32>} : memref<2x3x8x256xf32, #tpu.memory_space<vmem>>, vector<1x1x8x256xf32>,
    %657 = arith.mulf %597, %652 : vector<8x256xf32>
    %c1_309 = arith.constant 1 : index
    %c2_310 = arith.constant 2 : index
    %c0_311 = arith.constant 0 : index
    %c0_312 = arith.constant 0 : index
    %658 = vector.load %arg9[%c1_309, %c2_310, %c0_311, %c0_312] : memref<2x3x8x256xf32, #tpu.memory_space<vmem>>, vector<1x1x8x256xf32>
    %659 = vector.shape_cast %658 : vector<1x1x8x256xf32> to vector<8x256xf32>
    %660 = vector.shape_cast %657 : vector<8x256xf32> to vector<1x1x8x256xf32>
    tpu.vector_store %arg9[%c1_309, %c2_310, %c0_311, %c0_312], %660 {strides = array<i32>} : memref<2x3x8x256xf32, #tpu.memory_space<vmem>>, vector<1x1x8x256xf32>,
    return
  }
  func.func @transform_0(%arg0: i32, %arg1: i32) -> (i32, i32) {
    %c0_i32 = arith.constant 0 : i32
    %c0_i32_0 = arith.constant 0 : i32
    %c0_i32_1 = arith.constant 0 : i32
    return %c0_i32, %c0_i32_0 : i32, i32
  }
  func.func @transform_1(%arg0: i32, %arg1: i32) -> (i32, i32) {
    %c0_i32 = arith.constant 0 : i32
    %c0_i32_0 = arith.constant 0 : i32
    %c0_i32_1 = arith.constant 0 : i32
    return %c0_i32, %c0_i32_0 : i32, i32
  }
  func.func @transform_2(%arg0: i32, %arg1: i32) -> (i32, i32) {
    %c0_i32 = arith.constant 0 : i32
    %c0_i32_0 = arith.constant 0 : i32
    %c0_i32_1 = arith.constant 0 : i32
    return %c0_i32, %c0_i32_0 : i32, i32
  }
  func.func @transform_3(%arg0: i32, %arg1: i32) -> (i32, i32) {
    %c0_i32 = arith.constant 0 : i32
    %c0_i32_0 = arith.constant 0 : i32
    %c0_i32_1 = arith.constant 0 : i32
    return %c0_i32, %c0_i32_0 : i32, i32
  }
  func.func @transform_4(%arg0: i32, %arg1: i32) -> (i32, i32) {
    %c0_i32 = arith.constant 0 : i32
    return %arg0, %arg1 : i32, i32
  }
  func.func @transform_5(%arg0: i32, %arg1: i32) -> (i32, i32) {
    %c0_i32 = arith.constant 0 : i32
    return %arg0, %arg1 : i32, i32
  }
  func.func @transform_6(%arg0: i32, %arg1: i32) -> (i32, i32, i32, i32) {
    %c0_i32 = arith.constant 0 : i32
    %c0_i32_0 = arith.constant 0 : i32
    %c0_i32_1 = arith.constant 0 : i32
    return %c0_i32, %c0_i32_0, %arg0, %arg1 : i32, i32, i32, i32
  }
  func.func @transform_7(%arg0: i32, %arg1: i32) -> (i32, i32, i32, i32) {
    %c0_i32 = arith.constant 0 : i32
    %c0_i32_0 = arith.constant 0 : i32
    %c0_i32_1 = arith.constant 0 : i32
    return %c0_i32, %c0_i32_0, %arg0, %arg1 : i32, i32, i32, i32
  }
}

</mosaic_0001>

<llo_original>
// kernel: tpu_custom_call.1
$region0: #{tpu_custom_call.1}
  #allocation0 [shape = 'u32[]', space=smem, size = 0x4, offset = 0x4, fixed_abs, tag = 'smem constant byte address 0x4 - core index']
  #allocation1 [shape = 'u32[144,128]{1,0:T(1,128)}', space=vmem, size = 0x12000, scoped, tag = 'internal scratch']
  %s0 = inlined_call_operand.vmem [shape: f32[6,3], index: 0, kind: input, shape index: {}]
  %s1 = inlined_call_operand.vmem [shape: f32[6,3], index: 1, kind: input, shape index: {}]
  %s2 = inlined_call_operand.vmem [shape: f32[6,3], index: 2, kind: input, shape index: {}]
  %s3 = inlined_call_operand.vmem [shape: f32[6,3], index: 3, kind: input, shape index: {}]
  %s4 = inlined_call_operand.vmem [shape: f32[16,256], index: 4, kind: input, shape index: {}]
  %s5 = inlined_call_operand.vmem [shape: f32[16,256], index: 5, kind: input, shape index: {}]
  %s6 = inlined_call_operand.hbm [shape: f32[2,3,16,256], index: 6, kind: output, shape index: {0}]
  %s7 = inlined_call_operand.hbm [shape: f32[2,3,16,256], index: 7, kind: output, shape index: {1}]
  %8 = xla_tuple %s6, %s7
  %s9 = sld [smem:[#allocation0]]
  $region81: #{tpu_custom_call.1} parent=0
    _
  %s11 = ssub.s32 1, %s9
  %s12 = scalar_select 0, %s11, %s9
  $region1: #{tpu_custom_call.1} parent=0
    #allocation2 [shape = 'u8[4096]{0}', space=smem, size = 0x1000, scoped, tag = 'input window, operand 0, single buffered']
    #allocation3 [shape = 's32[2]{0}', space=sflag, size = 0x8, scoped, tag = 'scoped memory for tpu_custom_call.1']
    #allocation4 [shape = 's32[2]{0}', space=sflag, size = 0x8, scoped, tag = 'scoped memory for tpu_custom_call.1']
    #allocation5 [shape = 'u8[4096]{0}', space=smem, size = 0x1000, scoped, tag = 'input window, operand 1, single buffered']
    #allocation6 [shape = 's32[1]{0}', space=sflag, size = 0x4, scoped, tag = 'scoped memory for tpu_custom_call.1']
    #allocation7 [shape = 'u8[4096]{0}', space=smem, size = 0x1000, scoped, tag = 'input window, operand 2, single buffered']
    #allocation8 [shape = 'u8[4096]{0}', space=smem, size = 0x1000, scoped, tag = 'input window, operand 3, single buffered']
    #allocation9 [shape = 's32[1]{0}', space=sflag, size = 0x4, scoped, tag = 'scoped memory for tpu_custom_call.1']
    #allocation10 [shape = 'u8[98304]{0}', space=vmem, size = 0x18000, scoped, tag = 'output window, operand 0']
    #allocation11 [shape = 'u8[98304]{0}', space=vmem, size = 0x18000, scoped, tag = 'output window, operand 1']
    #allocation12 [shape = 's32[2]{0}', space=sflag, size = 0x8, scoped, tag = 'scoped memory for tpu_custom_call.1']
    %13 = vsyncpa [#allocation4], 0
    %14 = vsyncpa [#allocation6], 0
    %15 = vsyncpa [#allocation9], 0
    %16 = vsyncpa [#allocation3], 0
    %s17 = scalar_lea.sflag [#allocation3], 1
    %18 = vsyncpa %s17, 0
    %19 = vsyncpa [#allocation12], 0
    %s20 = scalar_lea.sflag [#allocation12], 1
    %21 = vsyncpa %s20, 0
    loop: start=0, step=1, limit=4
    $region2: #{tpu_custom_call.1} parent=1 // loop_pre_header
      _
    $region3: #{tpu_custom_call.1} parent=1 // loop_header
      %s23 = sphi 0, %s27
      %p24 = scmp.ge.s32.totalorder %s23, 4
      %s30 = sphi 0, %s42
      %s31 = sphi 0, %s38
      %s32 = sphi 0, %s30
      %s33 = sphi 0, %s31
      %s34 = sphi 0, %s32
      %s35 = sphi 0, %s33
      %s43 = sphi 0, %s43
      %s45 = sphi 0, %s43
      %s46 = sphi 0, %s45
      %s60 = sphi 0, %s46
      %s64 = sphi 0, %s64
      %s66 = sphi 0, %s64
      %s67 = sphi 0, %s66
      %s81 = sphi 0, %s67
      %s85 = sphi 0, %s85
      %s87 = sphi 0, %s85
      %s88 = sphi 0, %s87
      %s102 = sphi 0, %s88
      %s106 = sphi 0, %s106
      %s108 = sphi 0, %s106
      %s109 = sphi 0, %s108
      %s123 = sphi 0, %s109
      %s131 = sphi 0, %s133
      %s134 = sphi 0, %s131
      %s135 = sphi 0, %s134
      %s151 = sphi 0, %s135
      %s159 = sphi 0, %s161
      %s162 = sphi 0, %s159
      %s163 = sphi 0, %s162
      %s179 = sphi 0, %s163
      %s187 = sphi 0, %s189
      %s190 = sphi 0, %s187
      %s191 = sphi 0, %s190
      %s207 = sphi 0, %s191
      %s215 = sphi 0, %s217
      %s218 = sphi 0, %s215
      %s219 = sphi 0, %s218
      %s235 = sphi 0, %s219
    $region4: #{tpu_custom_call.1} parent=1 // loop_header_branch
      %26 = sbr.rel (%p24) target = $region8
    $region5: #{tpu_custom_call.1} parent=1 // loop_body
      %s28 = ssub.s32 %s23, 1
      %s29 = ssub.s32 %s23, 2
      %s36 = sadd.s32 1, %s31
      %p37 = scmp.ge.s32.totalorder %s36, 1
      %s38 = scalar_select %p37, 0, %s36
      %s39 = sadd.s32 1, %s30
      %s40 = scalar_select %p37, %s39, %s30
      %p41 = scmp.ge.s32.totalorder %s40, 2
      %s42 = scalar_select %p41, 0, %s40
      %s44 = sadd.s32 %s43, 1
      %p47 = scmp.eq.s32.totalorder %s23, 1
      %p48 = scmp.ne.s32.totalorder %s43, %s45
      %p49 = scmp.eq.s32.totalorder %s23, 0
      %p50 = por %p48, %p49
      %p51 = scmp.ne.s32.totalorder %s43, %s45
      %p52 = scmp.eq.s32.totalorder %s28, 1
      %p53 = por %p51, %p52
      %p54 = scmp.ne.s32.totalorder %s45, %s46
      %p55 = scmp.eq.s32.totalorder %s28, 0
      %p56 = por %p54, %p55
      %p57 = scmp.ne.s32.totalorder %s45, %s46
      %p58 = scmp.eq.s32.totalorder %s29, 1
      %p59 = por %p57, %p58
      %p61 = scmp.ne.s32.totalorder %s46, %s60
      %p62 = scmp.eq.s32.totalorder %s29, 0
      %p63 = por %p61, %p62
      %s65 = sadd.s32 %s64, 1
      %p68 = scmp.eq.s32.totalorder %s23, 1
      %p69 = scmp.ne.s32.totalorder %s64, %s66
      %p70 = scmp.eq.s32.totalorder %s23, 0
      %p71 = por %p69, %p70
      %p72 = scmp.ne.s32.totalorder %s64, %s66
      %p73 = scmp.eq.s32.totalorder %s28, 1
      %p74 = por %p72, %p73
      %p75 = scmp.ne.s32.totalorder %s66, %s67
      %p76 = scmp.eq.s32.totalorder %s28, 0
      %p77 = por %p75, %p76
      %p78 = scmp.ne.s32.totalorder %s66, %s67
      %p79 = scmp.eq.s32.totalorder %s29, 1
      %p80 = por %p78, %p79
      %p82 = scmp.ne.s32.totalorder %s67, %s81
      %p83 = scmp.eq.s32.totalorder %s29, 0
      %p84 = por %p82, %p83
      %s86 = sadd.s32 %s85, 1
      %p89 = scmp.eq.s32.totalorder %s23, 1
      %p90 = scmp.ne.s32.totalorder %s85, %s87
      %p91 = scmp.eq.s32.totalorder %s23, 0
      %p92 = por %p90, %p91
      %p93 = scmp.ne.s32.totalorder %s85, %s87
      %p94 = scmp.eq.s32.totalorder %s28, 1
      %p95 = por %p93, %p94
      %p96 = scmp.ne.s32.totalorder %s87, %s88
      %p97 = scmp.eq.s32.totalorder %s28, 0
      %p98 = por %p96, %p97
      %p99 = scmp.ne.s32.totalorder %s87, %s88
      %p100 = scmp.eq.s32.totalorder %s29, 1
      %p101 = por %p99, %p100
      %p103 = scmp.ne.s32.totalorder %s88, %s102
      %p104 = scmp.eq.s32.totalorder %s29, 0
      %p105 = por %p103, %p104
      %s107 = sadd.s32 %s106, 1
      %p110 = scmp.eq.s32.totalorder %s23, 1
      %p111 = scmp.ne.s32.totalorder %s106, %s108
      %p112 = scmp.eq.s32.totalorder %s23, 0
      %p113 = por %p111, %p112
      %p114 = scmp.ne.s32.totalorder %s106, %s108
      %p115 = scmp.eq.s32.totalorder %s28, 1
      %p116 = por %p114, %p115
      %p117 = scmp.ne.s32.totalorder %s108, %s109
      %p118 = scmp.eq.s32.totalorder %s28, 0
      %p119 = por %p117, %p118
      %p120 = scmp.ne.s32.totalorder %s108, %s109
      %p121 = scmp.eq.s32.totalorder %s29, 1
      %p122 = por %p120, %p121
      %p124 = scmp.ne.s32.totalorder %s109, %s123
      %p125 = scmp.eq.s32.totalorder %s29, 0
      %p126 = por %p124, %p125
      %s127 = ssub.s32 %s30, %s42
      %s128 = ssub.s32 %s31, %s38
      %s129 = sor.u32 %s127, %s128
      %p130 = scmp.eq.s32.totalorder %s129, 0
      %s132 = sadd.s32 %s131, 1
      %s133 = scalar_select %p130, %s131, %s132
      %p136 = pneg %p130
      %p137 = scmp.eq.s32.totalorder %s23, 1
      %p138 = por %p136, %p137
      %p139 = scmp.ne.s32.totalorder %s131, %s134
      %p140 = scmp.eq.s32.totalorder %s23, 0
      %p141 = por %p139, %p140
      %p142 = scmp.ne.s32.totalorder %s131, %s134
      %p143 = scmp.eq.s32.totalorder %s28, 1
      %p144 = por %p142, %p143
      %p145 = scmp.ne.s32.totalorder %s134, %s135
      %p146 = scmp.eq.s32.totalorder %s28, 0
      %p147 = por %p145, %p146
      %p148 = scmp.ne.s32.totalorder %s134, %s135
      %p149 = scmp.eq.s32.totalorder %s29, 1
      %p150 = por %p148, %p149
      %p152 = scmp.ne.s32.totalorder %s135, %s151
      %p153 = scmp.eq.s32.totalorder %s29, 0
      %p154 = por %p152, %p153
      %s155 = ssub.s32 %s30, %s42
      %s156 = ssub.s32 %s31, %s38
      %s157 = sor.u32 %s155, %s156
      %p158 = scmp.eq.s32.totalorder %s157, 0
      %s160 = sadd.s32 %s159, 1
      %s161 = scalar_select %p158, %s159, %s160
      %p164 = pneg %p158
      %p165 = scmp.eq.s32.totalorder %s23, 1
      %p166 = por %p164, %p165
      %p167 = scmp.ne.s32.totalorder %s159, %s162
      %p168 = scmp.eq.s32.totalorder %s23, 0
      %p169 = por %p167, %p168
      %p170 = scmp.ne.s32.totalorder %s159, %s162
      %p171 = scmp.eq.s32.totalorder %s28, 1
      %p172 = por %p170, %p171
      %p173 = scmp.ne.s32.totalorder %s162, %s163
      %p174 = scmp.eq.s32.totalorder %s28, 0
      %p175 = por %p173, %p174
      %p176 = scmp.ne.s32.totalorder %s162, %s163
      %p177 = scmp.eq.s32.totalorder %s29, 1
      %p178 = por %p176, %p177
      %p180 = scmp.ne.s32.totalorder %s163, %s179
      %p181 = scmp.eq.s32.totalorder %s29, 0
      %p182 = por %p180, %p181
      %s183 = ssub.s32 %s30, %s42
      %s184 = ssub.s32 %s31, %s38
      %s185 = sor.u32 %s183, %s184
      %p186 = scmp.eq.s32.totalorder %s185, 0
      %s188 = sadd.s32 %s187, 1
      %s189 = scalar_select %p186, %s187, %s188
      %p192 = pneg %p186
      %p193 = scmp.eq.s32.totalorder %s23, 1
      %p194 = por %p192, %p193
      %p195 = scmp.ne.s32.totalorder %s187, %s190
      %p196 = scmp.eq.s32.totalorder %s23, 0
      %p197 = por %p195, %p196
      %p198 = scmp.ne.s32.totalorder %s187, %s190
      %p199 = scmp.eq.s32.totalorder %s28, 1
      %p200 = por %p198, %p199
      %p201 = scmp.ne.s32.totalorder %s190, %s191
      %p202 = scmp.eq.s32.totalorder %s28, 0
      %p203 = por %p201, %p202
      %p204 = scmp.ne.s32.totalorder %s190, %s191
      %p205 = scmp.eq.s32.totalorder %s29, 1
      %p206 = por %p204, %p205
      %p208 = scmp.ne.s32.totalorder %s191, %s207
      %p209 = scmp.eq.s32.totalorder %s29, 0
      %p210 = por %p208, %p209
      %s211 = ssub.s32 %s30, %s42
      %s212 = ssub.s32 %s31, %s38
      %s213 = sor.u32 %s211, %s212
      %p214 = scmp.eq.s32.totalorder %s213, 0
      %s216 = sadd.s32 %s215, 1
      %s217 = scalar_select %p214, %s215, %s216
      %p220 = pneg %p214
      %p221 = scmp.eq.s32.totalorder %s23, 1
      %p222 = por %p220, %p221
      %p223 = scmp.ne.s32.totalorder %s215, %s218
      %p224 = scmp.eq.s32.totalorder %s23, 0
      %p225 = por %p223, %p224
      %p226 = scmp.ne.s32.totalorder %s215, %s218
      %p227 = scmp.eq.s32.totalorder %s28, 1
      %p228 = por %p226, %p227
      %p229 = scmp.ne.s32.totalorder %s218, %s219
      %p230 = scmp.eq.s32.totalorder %s28, 0
      %p231 = por %p229, %p230
      %p232 = scmp.ne.s32.totalorder %s218, %s219
      %p233 = scmp.eq.s32.totalorder %s29, 1
      %p234 = por %p232, %p233
      %p236 = scmp.ne.s32.totalorder %s219, %s235
      %p237 = scmp.eq.s32.totalorder %s29, 0
      %p238 = por %p236, %p237
      %p239 = scmp.le.s32.totalorder 1, %s23
      %p240 = scmp.lt.s32.totalorder %s23, 3
      %p241 = pnand %p239, %p240
      %p242 = pneg %p241
      // Predicated region
      $region9: #{tpu_custom_call.1} parent=5 // pred_check
        _
      $region10: #{tpu_custom_call.1} parent=5 // pred_check_branch
        %244 = sbr.rel (%p241) target = $region12
      $region11: #{tpu_custom_call.1} parent=5 // pred_region
        %s245 = ssub.s32 %s23, 1
        // Predicated region
        $region13: #{tpu_custom_call.1} parent=11 // pred_check
          %p246 = pneg %p56
        $region14: #{tpu_custom_call.1} parent=11 // pred_check_branch
          %248 = sbr.rel (%p246) target = $region16
        $region15: #{tpu_custom_call.1} parent=11 // pred_region
          %s250 = ssub.s32 128, 128
          %251 = vsyncadd [#allocation4], %s250
          %s253 = sshll.u32 %s0, 4
          %s254 = int_to_ptr.vmem [resolvable:$true] %s253
          %256 = dma.vmem_to_smem %s254, 128, [#allocation2], [#allocation4]
        $region16: #{tpu_custom_call.1} parent=11 // pred_fallthru
          _
        // Predicated region
        $region17: #{tpu_custom_call.1} parent=11 // pred_check
          %p257 = pneg %p77
        $region18: #{tpu_custom_call.1} parent=11 // pred_check_branch
          %259 = sbr.rel (%p257) target = $region20
        $region19: #{tpu_custom_call.1} parent=11 // pred_region
          %s261 = ssub.s32 128, 128
          %262 = vsyncadd [#allocation6], %s261
          %s264 = sshll.u32 %s1, 4
          %s265 = int_to_ptr.vmem [resolvable:$true] %s264
          %267 = dma.vmem_to_smem %s265, 128, [#allocation5], [#allocation6]
        $region20: #{tpu_custom_call.1} parent=11 // pred_fallthru
          _
        // Predicated region
        $region21: #{tpu_custom_call.1} parent=11 // pred_check
          %p268 = pneg %p98
        $region22: #{tpu_custom_call.1} parent=11 // pred_check_branch
          %270 = sbr.rel (%p268) target = $region24
        $region23: #{tpu_custom_call.1} parent=11 // pred_region
          %s272 = ssub.s32 128, 128
          %273 = vsyncadd [#allocation6], %s272
          %s275 = sshll.u32 %s2, 4
          %s276 = int_to_ptr.vmem [resolvable:$true] %s275
          %278 = dma.vmem_to_smem %s276, 128, [#allocation7], [#allocation6]
        $region24: #{tpu_custom_call.1} parent=11 // pred_fallthru
          _
        // Predicated region
        $region25: #{tpu_custom_call.1} parent=11 // pred_check
          %p279 = pneg %p119
        $region26: #{tpu_custom_call.1} parent=11 // pred_check_branch
          %281 = sbr.rel (%p279) target = $region28
        $region27: #{tpu_custom_call.1} parent=11 // pred_region
          %s283 = ssub.s32 128, 128
          %284 = vsyncadd [#allocation9], %s283
          %s286 = sshll.u32 %s3, 4
          %s287 = int_to_ptr.vmem [resolvable:$true] %s286
          %289 = dma.vmem_to_smem %s287, 128, [#allocation8], [#allocation9]
        $region28: #{tpu_custom_call.1} parent=11 // pred_fallthru
          _
      $region12: #{tpu_custom_call.1} parent=5 // pred_fallthru
        _
      %p290 = scmp.lt.s32.totalorder %s23, 2
      // Predicated region
      $region29: #{tpu_custom_call.1} parent=5 // pred_check
        %p291 = pneg %p290
      $region30: #{tpu_custom_call.1} parent=5 // pred_check_branch
        %293 = sbr.rel (%p291) target = $region32
      $region31: #{tpu_custom_call.1} parent=5 // pred_region
        // Predicated region
        $region33: #{tpu_custom_call.1} parent=31 // pred_check
          %p294 = pneg %p141
        $region34: #{tpu_custom_call.1} parent=31 // pred_check_branch
          %296 = sbr.rel (%p294) target = $region36
        $region35: #{tpu_custom_call.1} parent=31 // pred_region
          %s297 = smul.u32 2, %s31
          %p298 = scmp.lt.s32.totalorder %s30, 1
          %s299 = scalar_select %p298, %s30, 1
          %p300 = scmp.lt.s32.totalorder %s297, 1
          %s301 = scalar_select %p300, %s297, 1
          %s302 = smul.addr %s299, 2
          %s303 = sadd.s32 %s301, %s302
          %s304 = smul.addr %s303, 8
          %s305 = scalar_lea.vmem %s4, %s304
          %s306 = smul.u32 2, %s31
        $region36: #{tpu_custom_call.1} parent=31 // pred_fallthru
          _
        // Predicated region
        $region37: #{tpu_custom_call.1} parent=31 // pred_check
          %p307 = pneg %p169
        $region38: #{tpu_custom_call.1} parent=31 // pred_check_branch
          %309 = sbr.rel (%p307) target = $region40
        $region39: #{tpu_custom_call.1} parent=31 // pred_region
          %s310 = smul.u32 2, %s31
          %p311 = scmp.lt.s32.totalorder %s30, 1
          %s312 = scalar_select %p311, %s30, 1
          %p313 = scmp.lt.s32.totalorder %s310, 1
          %s314 = scalar_select %p313, %s310, 1
          %s315 = smul.addr %s312, 2
          %s316 = sadd.s32 %s314, %s315
          %s317 = smul.addr %s316, 8
          %s318 = scalar_lea.vmem %s5, %s317
          %s319 = smul.u32 2, %s31
        $region40: #{tpu_custom_call.1} parent=31 // pred_fallthru
          _
      $region32: #{tpu_custom_call.1} parent=5 // pred_fallthru
        _
      %p320 = scmp.le.s32.totalorder 1, %s23
      %p321 = scmp.lt.s32.totalorder %s23, 3
      %p322 = pnand %p320, %p321
      %p323 = pneg %p322
      // Predicated region
      $region41: #{tpu_custom_call.1} parent=5 // pred_check
        _
      $region42: #{tpu_custom_call.1} parent=5 // pred_check_branch
        %325 = sbr.rel (%p322) target = $region44
      $region43: #{tpu_custom_call.1} parent=5 // pred_region
        %s326 = ssub.s32 %s23, 1
        // Predicated region
        $region45: #{tpu_custom_call.1} parent=43 // pred_check
          %p327 = pneg %p56
        $region46: #{tpu_custom_call.1} parent=43 // pred_check_branch
          %329 = sbr.rel (%p327) target = $region48
        $region47: #{tpu_custom_call.1} parent=43 // pred_region
          %330 = dma.done [#allocation4], 128
        $region48: #{tpu_custom_call.1} parent=43 // pred_fallthru
          _
        // Predicated region
        $region49: #{tpu_custom_call.1} parent=43 // pred_check
          %p331 = pneg %p77
        $region50: #{tpu_custom_call.1} parent=43 // pred_check_branch
          %333 = sbr.rel (%p331) target = $region52
        $region51: #{tpu_custom_call.1} parent=43 // pred_region
          %334 = dma.done [#allocation6], 128
        $region52: #{tpu_custom_call.1} parent=43 // pred_fallthru
          _
        // Predicated region
        $region53: #{tpu_custom_call.1} parent=43 // pred_check
          %p335 = pneg %p98
        $region54: #{tpu_custom_call.1} parent=43 // pred_check_branch
          %337 = sbr.rel (%p335) target = $region56
        $region55: #{tpu_custom_call.1} parent=43 // pred_region
          %338 = dma.done [#allocation6], 128
        $region56: #{tpu_custom_call.1} parent=43 // pred_fallthru
          _
        // Predicated region
        $region57: #{tpu_custom_call.1} parent=43 // pred_check
          %p339 = pneg %p119
        $region58: #{tpu_custom_call.1} parent=43 // pred_check_branch
          %341 = sbr.rel (%p339) target = $region60
        $region59: #{tpu_custom_call.1} parent=43 // pred_region
          %342 = dma.done [#allocation9], 128
        $region60: #{tpu_custom_call.1} parent=43 // pred_fallthru
          _
        %343 = sfence
        %p344 = pneg %p56
        %p345 = pneg %p53
        %p346 = pneg %p77
        %p347 = pneg %p74
        %p348 = pneg %p98
        %p349 = pneg %p95
        %p350 = pneg %p119
        %p351 = pneg %p116
        %s352 = smul.u32 2, %s33
        %p353 = scmp.lt.s32.totalorder %s32, 1
        %s354 = scalar_select %p353, %s32, 1
        %p355 = scmp.lt.s32.totalorder %s352, 1
        %s356 = scalar_select %p355, %s352, 1
        %s357 = smul.addr %s354, 2
        %s358 = sadd.s32 %s356, %s357
        %s359 = smul.addr %s358, 8
        %s360 = scalar_lea.vmem %s4, %s359
        %p361 = pneg %p147
        %p362 = pneg %p144
        %s363 = smul.u32 2, %s33
        %p364 = scmp.lt.s32.totalorder %s32, 1
        %s365 = scalar_select %p364, %s32, 1
        %p366 = scmp.lt.s32.totalorder %s363, 1
        %s367 = scalar_select %p366, %s363, 1
        %s368 = smul.addr %s365, 2
        %s369 = sadd.s32 %s367, %s368
        %s370 = smul.addr %s369, 8
        %s371 = scalar_lea.vmem %s5, %s370
        %p372 = pneg %p175
        %p373 = pneg %p172
        %p374 = pneg %p203
        %p375 = pneg %p200
        %s376 = sand.u32 %s190, 1
        %s377 = scalar_lea.sflag [#allocation3], %s376
        %s378 = sand.u32 %s190, 1
        %s379 = smul.addr %s378, 96
        %s380 = scalar_lea.vmem [#allocation10], %s379
        %p381 = pneg %p231
        %p382 = pneg %p228
        %s383 = sand.u32 %s218, 1
        %s384 = scalar_lea.sflag [#allocation12], %s383
        %s385 = sand.u32 %s218, 1
        %s386 = smul.addr %s385, 96
        %s387 = scalar_lea.vmem [#allocation11], %s386
        %s388 = smul.u32 2, %s33
        %p389 = scmp.lt.s32.totalorder %s32, 1
        %s390 = scalar_select %p389, %s32, 1
        %p391 = scmp.lt.s32.totalorder %s388, 1
        %s392 = scalar_select %p391, %s388, 1
        %s393 = smul.addr %s390, 2
        %s394 = sadd.s32 %s392, %s393
        %s395 = smul.addr %s394, 8
        %s396 = scalar_lea.vmem %s4, %s395
        %s397 = smul.u32 2, %s33
        %s398 = smul.u32 2, %s33
        %p399 = scmp.lt.s32.totalorder %s32, 1
        %s400 = scalar_select %p399, %s32, 1
        %p401 = scmp.lt.s32.totalorder %s398, 1
        %s402 = scalar_select %p401, %s398, 1
        %s403 = smul.addr %s400, 2
        %s404 = sadd.s32 %s402, %s403
        %s405 = smul.addr %s404, 8
        %s406 = scalar_lea.vmem %s5, %s405
        %s407 = smul.u32 2, %s33
        %s408 = smul.u32 2, %s33
        %s409 = smul.u32 2, %s33
        %v410 = vld [vmem:[%s396] sm:$0xff]
        %v411 = vld [vmem:[%s396 + $0x8] sm:$0xff]
        %v412 = vmax.f32 %v410, 0.1
        %v413 = vmax.f32 %v411, 0.1
        %v414 = vmin.f32 %v412, 0.3
        %v415 = vmin.f32 %v413, 0.3
        %v416 = vld [vmem:[%s406] sm:$0xff]
        %v417 = vld [vmem:[%s406 + $0x8] sm:$0xff]
        %v418 = vmax.f32 %v416, 0.1
        %v419 = vmax.f32 %v417, 0.1
        %v420 = vmin.f32 %v418, 0.3
        %v421 = vmin.f32 %v419, 0.3
        %v422 = vmul.f32 %v420, %v420
        %v423 = vmul.f32 %v421, %v421
        %v424 = vmul.f32 %v414, %v414
        %v425 = vmul.f32 %v415, %v415
        %v426 = vmul.f32 %v420, %v414
        %v427 = vmul.f32 %v421, %v415
        %s428 = sld [smem:[#allocation2 + $0x80]]
        %s429 = sld [smem:[#allocation7 + $0x80]]
        %v430 = vstv %s428
        %v431 = vmul.f32 %v430, %v420
        %v432 = vmul.f32 %v430, %v421
        %v433 = vstv %s429
        %v434 = vmul.f32 %v433, %v420
        %v435 = vmul.f32 %v433, %v421
        %s436 = sld [smem:[#allocation2 + $0x100]]
        %s437 = sld [smem:[#allocation7 + $0x100]]
        %v438 = vstv %s436
        %v439 = vmul.f32 %v438, %v414
        %v440 = vmul.f32 %v438, %v415
        %v441 = vadd.f32 %v431, %v439
        %v442 = vadd.f32 %v432, %v440
        %v443 = vstv %s437
        %v444 = vmul.f32 %v443, %v414
        %v445 = vmul.f32 %v443, %v415
        %v446 = vadd.f32 %v434, %v444
        %v447 = vadd.f32 %v435, %v445
        %s448 = sld [smem:[#allocation2 + $0x180]]
        %s449 = sld [smem:[#allocation7 + $0x180]]
        %v450 = vstv %s448
        %v451 = vmul.f32 %v450, %v422
        %v452 = vmul.f32 %v450, %v423
        %v453 = vadd.f32 %v441, %v451
        %v454 = vadd.f32 %v442, %v452
        %v455 = vstv %s449
        %v456 = vmul.f32 %v455, %v422
        %v457 = vmul.f32 %v455, %v423
        %v458 = vadd.f32 %v446, %v456
        %v459 = vadd.f32 %v447, %v457
        %s460 = sld [smem:[#allocation2 + $0x200]]
        %s461 = sld [smem:[#allocation7 + $0x200]]
        %v462 = vstv %s460
        %v463 = vmul.f32 %v462, %v426
        %v464 = vmul.f32 %v462, %v427
        %v465 = vadd.f32 %v453, %v463
        %v466 = vadd.f32 %v454, %v464
        %v467 = vstv %s461
        %v468 = vmul.f32 %v467, %v426
        %v469 = vmul.f32 %v467, %v427
        %v470 = vadd.f32 %v458, %v468
        %v471 = vadd.f32 %v459, %v469
        %s472 = sld [smem:[#allocation2 + $0x280]]
        %s473 = sld [smem:[#allocation7 + $0x280]]
        %v474 = vstv %s472
        %v475 = vmul.f32 %v474, %v424
        %v476 = vmul.f32 %v474, %v425
        %v477 = vadd.f32 %v465, %v475
        %v478 = vadd.f32 %v466, %v476
        %v479 = vstv %s473
        %v480 = vmul.f32 %v479, %v424
        %v481 = vmul.f32 %v479, %v425
        %v482 = vadd.f32 %v470, %v480
        %v483 = vadd.f32 %v471, %v481
        %s484 = sld [smem:[#allocation2]]
        %s485 = ssub.f32 %s484, 0.5
        %v486 = vstv %s485
        %v487 = vadd.f32 %v477, %v486
        %v488 = vadd.f32 %v478, %v486
        %s489 = sld [smem:[#allocation7]]
        %v490 = vstv %s489
        %v491 = vadd.f32 %v482, %v490
        %v492 = vadd.f32 %v483, %v490
        %v493 = vadd.f32 %v487, 0.5
        %v494 = vadd.f32 %v488, 0.5
        %v495 = vfloor.f32 %v493
        %v496 = vfloor.f32 %v494
        %v497 = vsub.f32 %v487, %v495
        %v498 = vsub.f32 %v488, %v496
        %v499 = vmul.f32 %v497, 2.0
        %v500 = vmul.f32 %v498, 2.0
        %v501 = vadd.f32 %v499, 0.5
        %v502 = vadd.f32 %v500, 0.5
        %v503 = vfloor.f32 %v501
        %v504 = vfloor.f32 %v502
        %v505 = vmul.f32 %v503, 0.5
        %v506 = vmul.f32 %v504, 0.5
        %v507 = vsub.f32 %v497, %v505
        %v508 = vsub.f32 %v498, %v506
        %v509 = vand.u32 2147483647, %v503
        %v510 = vand.u32 2147483647, %v504
        %v511 = vmul.f32 %v509, 2.0
        %v512 = vmul.f32 %v510, 2.0
        %v513 = vsub.f32 1.0, %v511
        %v514 = vsub.f32 1.0, %v512
        %v515 = vmul.f32 %v507, 6.2831855
        %v516 = vmul.f32 %v508, 6.2831855
        %v517 = vmul.f32 %v515, %v515
        %v518 = vmul.f32 %v516, %v516
        %v519 = vmul.f32 %v517, -2.5052108e-08
        %v520 = vmul.f32 %v518, -2.5052108e-08
        %v521 = vadd.f32 %v519, 2.7557319e-06
        %v522 = vadd.f32 %v520, 2.7557319e-06
        %v523 = vmul.f32 %v517, %v521
        %v524 = vmul.f32 %v518, %v522
        %v525 = vadd.f32 %v523, -0.0001984127
        %v526 = vadd.f32 %v524, -0.0001984127
        %v527 = vmul.f32 %v517, %v525
        %v528 = vmul.f32 %v518, %v526
        %v529 = vadd.f32 %v527, 0.008333334
        %v530 = vadd.f32 %v528, 0.008333334
        %v531 = vmul.f32 %v517, %v529
        %v532 = vmul.f32 %v518, %v530
        %v533 = vadd.f32 %v531, -0.16666667
        %v534 = vadd.f32 %v532, -0.16666667
        %v535 = vmul.f32 %v517, %v533
        %v536 = vmul.f32 %v518, %v534
        %v537 = vadd.f32 %v535, 1.0
        %v538 = vadd.f32 %v536, 1.0
        %v539 = vmul.f32 %v515, %v537
        %v540 = vmul.f32 %v516, %v538
        %v541 = vmul.f32 %v517, -2.755732e-07
        %v542 = vmul.f32 %v518, -2.755732e-07
        %v543 = vadd.f32 %v541, 2.4801588e-05
        %v544 = vadd.f32 %v542, 2.4801588e-05
        %v545 = vmul.f32 %v517, %v543
        %v546 = vmul.f32 %v518, %v544
        %v547 = vadd.f32 %v545, -0.0013888889
        %v548 = vadd.f32 %v546, -0.0013888889
        %v549 = vmul.f32 %v517, %v547
        %v550 = vmul.f32 %v518, %v548
        %v551 = vadd.f32 %v549, 0.041666668
        %v552 = vadd.f32 %v550, 0.041666668
        %v553 = vmul.f32 %v517, %v551
        %v554 = vmul.f32 %v518, %v552
        %v555 = vadd.f32 %v553, -0.5
        %v556 = vadd.f32 %v554, -0.5
        %v557 = vmul.f32 %v517, %v555
        %v558 = vmul.f32 %v518, %v556
        %v559 = vadd.f32 %v557, 1.0
        %v560 = vadd.f32 %v558, 1.0
        %v561 = vmul.f32 %v513, %v559
        %v562 = vmul.f32 %v514, %v560
        %v563 = vmul.f32 %v513, %v539
        %v564 = vmul.f32 %v514, %v540
        %v565 = vmul.f32 %v491, %v561
        %v566 = vmul.f32 %v492, %v562
        %567 = vst [vmem:[%s380] sm:$0xff] %v565
        %568 = vst [vmem:[%s380 + $0x8] sm:$0xff] %v566
        %v569 = vmul.f32 %v491, %v563
        %v570 = vmul.f32 %v492, %v564
        %571 = vst [vmem:[%s387] sm:$0xff] %v569
        %572 = vst [vmem:[%s387 + $0x8] sm:$0xff] %v570
        %s573 = sld [smem:[#allocation2 + $0x81]]
        %s574 = sld [smem:[#allocation7 + $0x81]]
        %v575 = vstv %s573
        %v576 = vmul.f32 %v575, %v420
        %v577 = vmul.f32 %v575, %v421
        %v578 = vstv %s574
        %v579 = vmul.f32 %v578, %v420
        %v580 = vmul.f32 %v578, %v421
        %s581 = sld [smem:[#allocation2 + $0x101]]
        %s582 = sld [smem:[#allocation7 + $0x101]]
        %v583 = vstv %s581
        %v584 = vmul.f32 %v583, %v414
        %v585 = vmul.f32 %v583, %v415
        %v586 = vadd.f32 %v576, %v584
        %v587 = vadd.f32 %v577, %v585
        %v588 = vstv %s582
        %v589 = vmul.f32 %v588, %v414
        %v590 = vmul.f32 %v588, %v415
        %v591 = vadd.f32 %v579, %v589
        %v592 = vadd.f32 %v580, %v590
        %s593 = sld [smem:[#allocation2 + $0x181]]
        %s594 = sld [smem:[#allocation7 + $0x181]]
        %v595 = vstv %s593
        %v596 = vmul.f32 %v595, %v422
        %v597 = vmul.f32 %v595, %v423
        %v598 = vadd.f32 %v586, %v596
        %v599 = vadd.f32 %v587, %v597
        %v600 = vstv %s594
        %v601 = vmul.f32 %v600, %v422
        %v602 = vmul.f32 %v600, %v423
        %v603 = vadd.f32 %v591, %v601
        %v604 = vadd.f32 %v592, %v602
        %s605 = sld [smem:[#allocation2 + $0x201]]
        %s606 = sld [smem:[#allocation7 + $0x201]]
        %v607 = vstv %s605
        %v608 = vmul.f32 %v607, %v426
        %v609 = vmul.f32 %v607, %v427
        %v610 = vadd.f32 %v598, %v608
        %v611 = vadd.f32 %v599, %v609
        %v612 = vstv %s606
        %v613 = vmul.f32 %v612, %v426
        %v614 = vmul.f32 %v612, %v427
        %v615 = vadd.f32 %v603, %v613
        %v616 = vadd.f32 %v604, %v614
        %s617 = sld [smem:[#allocation2 + $0x281]]
        %s618 = sld [smem:[#allocation7 + $0x281]]
        %v619 = vstv %s617
        %v620 = vmul.f32 %v619, %v424
        %v621 = vmul.f32 %v619, %v425
        %v622 = vadd.f32 %v610, %v620
        %v623 = vadd.f32 %v611, %v621
        %v624 = vstv %s618
        %v625 = vmul.f32 %v624, %v424
        %v626 = vmul.f32 %v624, %v425
        %v627 = vadd.f32 %v615, %v625
        %v628 = vadd.f32 %v616, %v626
        %s629 = sld [smem:[#allocation2 + $0x1]]
        %s630 = ssub.f32 %s629, 0.5
        %v631 = vstv %s630
        %v632 = vadd.f32 %v622, %v631
        %v633 = vadd.f32 %v623, %v631
        %s634 = sld [smem:[#allocation7 + $0x1]]
        %v635 = vstv %s634
        %v636 = vadd.f32 %v627, %v635
        %v637 = vadd.f32 %v628, %v635
        %v638 = vadd.f32 %v632, 0.5
        %v639 = vadd.f32 %v633, 0.5
        %v640 = vfloor.f32 %v638
        %v641 = vfloor.f32 %v639
        %v642 = vsub.f32 %v632, %v640
        %v643 = vsub.f32 %v633, %v641
        %v644 = vmul.f32 %v642, 2.0
        %v645 = vmul.f32 %v643, 2.0
        %v646 = vadd.f32 %v644, 0.5
        %v647 = vadd.f32 %v645, 0.5
        %v648 = vfloor.f32 %v646
        %v649 = vfloor.f32 %v647
        %v650 = vmul.f32 %v648, 0.5
        %v651 = vmul.f32 %v649, 0.5
        %v652 = vsub.f32 %v642, %v650
        %v653 = vsub.f32 %v643, %v651
        %v654 = vand.u32 2147483647, %v648
        %v655 = vand.u32 2147483647, %v649
        %v656 = vmul.f32 %v654, 2.0
        %v657 = vmul.f32 %v655, 2.0
        %v658 = vsub.f32 1.0, %v656
        %v659 = vsub.f32 1.0, %v657
        %v660 = vmul.f32 %v652, 6.2831855
        %v661 = vmul.f32 %v653, 6.2831855
        %v662 = vmul.f32 %v660, %v660
        %v663 = vmul.f32 %v661, %v661
        %v664 = vmul.f32 %v662, -2.5052108e-08
        %v665 = vmul.f32 %v663, -2.5052108e-08
        %v666 = vadd.f32 %v664, 2.7557319e-06
        %v667 = vadd.f32 %v665, 2.7557319e-06
        %v668 = vmul.f32 %v662, %v666
        %v669 = vmul.f32 %v663, %v667
        %v670 = vadd.f32 %v668, -0.0001984127
        %v671 = vadd.f32 %v669, -0.0001984127
        %v672 = vmul.f32 %v662, %v670
        %v673 = vmul.f32 %v663, %v671
        %v674 = vadd.f32 %v672, 0.008333334
        %v675 = vadd.f32 %v673, 0.008333334
        %v676 = vmul.f32 %v662, %v674
        %v677 = vmul.f32 %v663, %v675
        %v678 = vadd.f32 %v676, -0.16666667
        %v679 = vadd.f32 %v677, -0.16666667
        %v680 = vmul.f32 %v662, %v678
        %v681 = vmul.f32 %v663, %v679
        %v682 = vadd.f32 %v680, 1.0
        %v683 = vadd.f32 %v681, 1.0
        %v684 = vmul.f32 %v660, %v682
        %v685 = vmul.f32 %v661, %v683
        %v686 = vmul.f32 %v662, -2.755732e-07
        %v687 = vmul.f32 %v663, -2.755732e-07
        %v688 = vadd.f32 %v686, 2.4801588e-05
        %v689 = vadd.f32 %v687, 2.4801588e-05
        %v690 = vmul.f32 %v662, %v688
        %v691 = vmul.f32 %v663, %v689
        %v692 = vadd.f32 %v690, -0.0013888889
        %v693 = vadd.f32 %v691, -0.0013888889
        %v694 = vmul.f32 %v662, %v692
        %v695 = vmul.f32 %v663, %v693
        %v696 = vadd.f32 %v694, 0.041666668
        %v697 = vadd.f32 %v695, 0.041666668
        %v698 = vmul.f32 %v662, %v696
        %v699 = vmul.f32 %v663, %v697
        %v700 = vadd.f32 %v698, -0.5
        %v701 = vadd.f32 %v699, -0.5
        %v702 = vmul.f32 %v662, %v700
        %v703 = vmul.f32 %v663, %v701
        %v704 = vadd.f32 %v702, 1.0
        %v705 = vadd.f32 %v703, 1.0
        %v706 = vmul.f32 %v658, %v704
        %v707 = vmul.f32 %v659, %v705
        %v708 = vmul.f32 %v658, %v684
        %v709 = vmul.f32 %v659, %v685
        %v710 = vmul.f32 %v636, %v706
        %v711 = vmul.f32 %v637, %v707
        %s712 = scalar_lea.vmem %s380, 16 [#allocation10]
        %713 = vst [vmem:[%s712] sm:$0xff] %v710
        %714 = vst [vmem:[%s712 + $0x8] sm:$0xff] %v711
        %v715 = vmul.f32 %v636, %v708
        %v716 = vmul.f32 %v637, %v709
        %s717 = scalar_lea.vmem %s387, 16 [#allocation11]
        %718 = vst [vmem:[%s717] sm:$0xff] %v715
        %719 = vst [vmem:[%s717 + $0x8] sm:$0xff] %v716
        %s720 = sld [smem:[#allocation2 + $0x82]]
        %s721 = sld [smem:[#allocation7 + $0x82]]
        %v722 = vstv %s720
        %v723 = vmul.f32 %v722, %v420
        %v724 = vmul.f32 %v722, %v421
        %v725 = vstv %s721
        %v726 = vmul.f32 %v725, %v420
        %v727 = vmul.f32 %v725, %v421
        %s728 = sld [smem:[#allocation2 + $0x102]]
        %s729 = sld [smem:[#allocation7 + $0x102]]
        %v730 = vstv %s728
        %v731 = vmul.f32 %v730, %v414
        %v732 = vmul.f32 %v730, %v415
        %v733 = vadd.f32 %v723, %v731
        %v734 = vadd.f32 %v724, %v732
        %v735 = vstv %s729
        %v736 = vmul.f32 %v735, %v414
        %v737 = vmul.f32 %v735, %v415
        %v738 = vadd.f32 %v726, %v736
        %v739 = vadd.f32 %v727, %v737
        %s740 = sld [smem:[#allocation2 + $0x182]]
        %s741 = sld [smem:[#allocation7 + $0x182]]
        %v742 = vstv %s740
        %v743 = vmul.f32 %v742, %v422
        %v744 = vmul.f32 %v742, %v423
        %v745 = vadd.f32 %v733, %v743
        %v746 = vadd.f32 %v734, %v744
        %v747 = vstv %s741
        %v748 = vmul.f32 %v747, %v422
        %v749 = vmul.f32 %v747, %v423
        %v750 = vadd.f32 %v738, %v748
        %v751 = vadd.f32 %v739, %v749
        %s752 = sld [smem:[#allocation2 + $0x202]]
        %s753 = sld [smem:[#allocation7 + $0x202]]
        %v754 = vstv %s752
        %v755 = vmul.f32 %v754, %v426
        %v756 = vmul.f32 %v754, %v427
        %v757 = vadd.f32 %v745, %v755
        %v758 = vadd.f32 %v746, %v756
        %v759 = vstv %s753
        %v760 = vmul.f32 %v759, %v426
        %v761 = vmul.f32 %v759, %v427
        %v762 = vadd.f32 %v750, %v760
        %v763 = vadd.f32 %v751, %v761
        %s764 = sld [smem:[#allocation2 + $0x282]]
        %s765 = sld [smem:[#allocation7 + $0x282]]
        %v766 = vstv %s764
        %v767 = vmul.f32 %v766, %v424
        %v768 = vmul.f32 %v766, %v425
        %v769 = vadd.f32 %v757, %v767
        %v770 = vadd.f32 %v758, %v768
        %v771 = vstv %s765
        %v772 = vmul.f32 %v771, %v424
        %v773 = vmul.f32 %v771, %v425
        %v774 = vadd.f32 %v762, %v772
        %v775 = vadd.f32 %v763, %v773
        %s776 = sld [smem:[#allocation2 + $0x2]]
        %s777 = ssub.f32 %s776, 0.5
        %v778 = vstv %s777
        %v779 = vadd.f32 %v769, %v778
        %v780 = vadd.f32 %v770, %v778
        %s781 = sld [smem:[#allocation7 + $0x2]]
        %v782 = vstv %s781
        %v783 = vadd.f32 %v774, %v782
        %v784 = vadd.f32 %v775, %v782
        %v785 = vadd.f32 %v779, 0.5
        %v786 = vadd.f32 %v780, 0.5
        %v787 = vfloor.f32 %v785
        %v788 = vfloor.f32 %v786
        %v789 = vsub.f32 %v779, %v787
        %v790 = vsub.f32 %v780, %v788
        %v791 = vmul.f32 %v789, 2.0
        %v792 = vmul.f32 %v790, 2.0
        %v793 = vadd.f32 %v791, 0.5
        %v794 = vadd.f32 %v792, 0.5
        %v795 = vfloor.f32 %v793
        %v796 = vfloor.f32 %v794
        %v797 = vmul.f32 %v795, 0.5
        %v798 = vmul.f32 %v796, 0.5
        %v799 = vsub.f32 %v789, %v797
        %v800 = vsub.f32 %v790, %v798
        %v801 = vand.u32 2147483647, %v795
        %v802 = vand.u32 2147483647, %v796
        %v803 = vmul.f32 %v801, 2.0
        %v804 = vmul.f32 %v802, 2.0
        %v805 = vsub.f32 1.0, %v803
        %v806 = vsub.f32 1.0, %v804
        %v807 = vmul.f32 %v799, 6.2831855
        %v808 = vmul.f32 %v800, 6.2831855
        %v809 = vmul.f32 %v807, %v807
        %v810 = vmul.f32 %v808, %v808
        %v811 = vmul.f32 %v809, -2.5052108e-08
        %v812 = vmul.f32 %v810, -2.5052108e-08
        %v813 = vadd.f32 %v811, 2.7557319e-06
        %v814 = vadd.f32 %v812, 2.7557319e-06
        %v815 = vmul.f32 %v809, %v813
        %v816 = vmul.f32 %v810, %v814
        %v817 = vadd.f32 %v815, -0.0001984127
        %v818 = vadd.f32 %v816, -0.0001984127
        %v819 = vmul.f32 %v809, %v817
        %v820 = vmul.f32 %v810, %v818
        %v821 = vadd.f32 %v819, 0.008333334
        %v822 = vadd.f32 %v820, 0.008333334
        %v823 = vmul.f32 %v809, %v821
        %v824 = vmul.f32 %v810, %v822
        %v825 = vadd.f32 %v823, -0.16666667
        %v826 = vadd.f32 %v824, -0.16666667
        %v827 = vmul.f32 %v809, %v825
        %v828 = vmul.f32 %v810, %v826
        %v829 = vadd.f32 %v827, 1.0
        %v830 = vadd.f32 %v828, 1.0
        %v831 = vmul.f32 %v807, %v829
        %v832 = vmul.f32 %v808, %v830
        %v833 = vmul.f32 %v809, -2.755732e-07
        %v834 = vmul.f32 %v810, -2.755732e-07
        %v835 = vadd.f32 %v833, 2.4801588e-05
        %v836 = vadd.f32 %v834, 2.4801588e-05
        %v837 = vmul.f32 %v809, %v835
        %v838 = vmul.f32 %v810, %v836
        %v839 = vadd.f32 %v837, -0.0013888889
        %v840 = vadd.f32 %v838, -0.0013888889
        %v841 = vmul.f32 %v809, %v839
        %v842 = vmul.f32 %v810, %v840
        %v843 = vadd.f32 %v841, 0.041666668
        %v844 = vadd.f32 %v842, 0.041666668
        %v845 = vmul.f32 %v809, %v843
        %v846 = vmul.f32 %v810, %v844
        %v847 = vadd.f32 %v845, -0.5
        %v848 = vadd.f32 %v846, -0.5
        %v849 = vmul.f32 %v809, %v847
        %v850 = vmul.f32 %v810, %v848
        %v851 = vadd.f32 %v849, 1.0
        %v852 = vadd.f32 %v850, 1.0
        %v853 = vmul.f32 %v805, %v851
        %v854 = vmul.f32 %v806, %v852
        %v855 = vmul.f32 %v805, %v831
        %v856 = vmul.f32 %v806, %v832
        %v857 = vmul.f32 %v783, %v853
        %v858 = vmul.f32 %v784, %v854
        %s859 = scalar_lea.vmem %s380, 32 [#allocation10]
        %860 = vst [vmem:[%s859] sm:$0xff] %v857
        %861 = vst [vmem:[%s859 + $0x8] sm:$0xff] %v858
        %v862 = vmul.f32 %v783, %v855
        %v863 = vmul.f32 %v784, %v856
        %s864 = scalar_lea.vmem %s387, 32 [#allocation11]
        %865 = vst [vmem:[%s864] sm:$0xff] %v862
        %866 = vst [vmem:[%s864 + $0x8] sm:$0xff] %v863
        %s867 = sld [smem:[#allocation5 + $0x80]]
        %s868 = sld [smem:[#allocation8 + $0x80]]
        %v869 = vstv %s867
        %v870 = vmul.f32 %v869, %v420
        %v871 = vmul.f32 %v869, %v421
        %v872 = vstv %s868
        %v873 = vmul.f32 %v872, %v420
        %v874 = vmul.f32 %v872, %v421
        %s875 = sld [smem:[#allocation5 + $0x100]]
        %s876 = sld [smem:[#allocation8 + $0x100]]
        %v877 = vstv %s875
        %v878 = vmul.f32 %v877, %v414
        %v879 = vmul.f32 %v877, %v415
        %v880 = vadd.f32 %v870, %v878
        %v881 = vadd.f32 %v871, %v879
        %v882 = vstv %s876
        %v883 = vmul.f32 %v882, %v414
        %v884 = vmul.f32 %v882, %v415
        %v885 = vadd.f32 %v873, %v883
        %v886 = vadd.f32 %v874, %v884
        %s887 = sld [smem:[#allocation5 + $0x180]]
        %s888 = sld [smem:[#allocation8 + $0x180]]
        %v889 = vstv %s887
        %v890 = vmul.f32 %v889, %v422
        %v891 = vmul.f32 %v889, %v423
        %v892 = vadd.f32 %v880, %v890
        %v893 = vadd.f32 %v881, %v891
        %v894 = vstv %s888
        %v895 = vmul.f32 %v894, %v422
        %v896 = vmul.f32 %v894, %v423
        %v897 = vadd.f32 %v885, %v895
        %v898 = vadd.f32 %v886, %v896
        %s899 = sld [smem:[#allocation5 + $0x200]]
        %s900 = sld [smem:[#allocation8 + $0x200]]
        %v901 = vstv %s899
        %v902 = vmul.f32 %v901, %v426
        %v903 = vmul.f32 %v901, %v427
        %v904 = vadd.f32 %v892, %v902
        %v905 = vadd.f32 %v893, %v903
        %v906 = vstv %s900
        %v907 = vmul.f32 %v906, %v426
        %v908 = vmul.f32 %v906, %v427
        %v909 = vadd.f32 %v897, %v907
        %v910 = vadd.f32 %v898, %v908
        %s911 = sld [smem:[#allocation5 + $0x280]]
        %s912 = sld [smem:[#allocation8 + $0x280]]
        %v913 = vstv %s911
        %v914 = vmul.f32 %v913, %v424
        %v915 = vmul.f32 %v913, %v425
        %v916 = vadd.f32 %v904, %v914
        %v917 = vadd.f32 %v905, %v915
        %v918 = vstv %s912
        %v919 = vmul.f32 %v918, %v424
        %v920 = vmul.f32 %v918, %v425
        %v921 = vadd.f32 %v909, %v919
        %v922 = vadd.f32 %v910, %v920
        %s923 = sld [smem:[#allocation5]]
        %s924 = ssub.f32 %s923, 0.5
        %v925 = vstv %s924
        %v926 = vadd.f32 %v916, %v925
        %v927 = vadd.f32 %v917, %v925
        %s928 = sld [smem:[#allocation8]]
        %v929 = vstv %s928
        %v930 = vadd.f32 %v921, %v929
        %v931 = vadd.f32 %v922, %v929
        %v932 = vadd.f32 %v926, 0.5
        %v933 = vadd.f32 %v927, 0.5
        %v934 = vfloor.f32 %v932
        %v935 = vfloor.f32 %v933
        %v936 = vsub.f32 %v926, %v934
        %v937 = vsub.f32 %v927, %v935
        %v938 = vmul.f32 %v936, 2.0
        %v939 = vmul.f32 %v937, 2.0
        %v940 = vadd.f32 %v938, 0.5
        %v941 = vadd.f32 %v939, 0.5
        %v942 = vfloor.f32 %v940
        %v943 = vfloor.f32 %v941
        %v944 = vmul.f32 %v942, 0.5
        %v945 = vmul.f32 %v943, 0.5
        %v946 = vsub.f32 %v936, %v944
        %v947 = vsub.f32 %v937, %v945
        %v948 = vand.u32 2147483647, %v942
        %v949 = vand.u32 2147483647, %v943
        %v950 = vmul.f32 %v948, 2.0
        %v951 = vmul.f32 %v949, 2.0
        %v952 = vsub.f32 1.0, %v950
        %v953 = vsub.f32 1.0, %v951
        %v954 = vmul.f32 %v946, 6.2831855
        %v955 = vmul.f32 %v947, 6.2831855
        %v956 = vmul.f32 %v954, %v954
        %v957 = vmul.f32 %v955, %v955
        %v958 = vmul.f32 %v956, -2.5052108e-08
        %v959 = vmul.f32 %v957, -2.5052108e-08
        %v960 = vadd.f32 %v958, 2.7557319e-06
        %v961 = vadd.f32 %v959, 2.7557319e-06
        %v962 = vmul.f32 %v956, %v960
        %v963 = vmul.f32 %v957, %v961
        %v964 = vadd.f32 %v962, -0.0001984127
        %v965 = vadd.f32 %v963, -0.0001984127
        %v966 = vmul.f32 %v956, %v964
        %v967 = vmul.f32 %v957, %v965
        %v968 = vadd.f32 %v966, 0.008333334
        %v969 = vadd.f32 %v967, 0.008333334
        %v970 = vmul.f32 %v956, %v968
        %v971 = vmul.f32 %v957, %v969
        %v972 = vadd.f32 %v970, -0.16666667
        %v973 = vadd.f32 %v971, -0.16666667
        %v974 = vmul.f32 %v956, %v972
        %v975 = vmul.f32 %v957, %v973
        %v976 = vadd.f32 %v974, 1.0
        %v977 = vadd.f32 %v975, 1.0
        %v978 = vmul.f32 %v954, %v976
        %v979 = vmul.f32 %v955, %v977
        %v980 = vmul.f32 %v956, -2.755732e-07
        %v981 = vmul.f32 %v957, -2.755732e-07
        %v982 = vadd.f32 %v980, 2.4801588e-05
        %v983 = vadd.f32 %v981, 2.4801588e-05
        %v984 = vmul.f32 %v956, %v982
        %v985 = vmul.f32 %v957, %v983
        %v986 = vadd.f32 %v984, -0.0013888889
        %v987 = vadd.f32 %v985, -0.0013888889
        %v988 = vmul.f32 %v956, %v986
        %v989 = vmul.f32 %v957, %v987
        %v990 = vadd.f32 %v988, 0.041666668
        %v991 = vadd.f32 %v989, 0.041666668
        %v992 = vmul.f32 %v956, %v990
        %v993 = vmul.f32 %v957, %v991
        %v994 = vadd.f32 %v992, -0.5
        %v995 = vadd.f32 %v993, -0.5
        %v996 = vmul.f32 %v956, %v994
        %v997 = vmul.f32 %v957, %v995
        %v998 = vadd.f32 %v996, 1.0
        %v999 = vadd.f32 %v997, 1.0
        %v1000 = vmul.f32 %v952, %v998
        %v1001 = vmul.f32 %v953, %v999
        %v1002 = vmul.f32 %v952, %v978
        %v1003 = vmul.f32 %v953, %v979
        %v1004 = vmul.f32 %v930, %v1000
        %v1005 = vmul.f32 %v931, %v1001
        %s1006 = scalar_lea.vmem %s380, 48 [#allocation10]
        %1007 = vst [vmem:[%s1006] sm:$0xff] %v1004
        %1008 = vst [vmem:[%s1006 + $0x8] sm:$0xff] %v1005
        %v1009 = vmul.f32 %v930, %v1002
        %v1010 = vmul.f32 %v931, %v1003
        %s1011 = scalar_lea.vmem %s387, 48 [#allocation11]
        %1012 = vst [vmem:[%s1011] sm:$0xff] %v1009
        %1013 = vst [vmem:[%s1011 + $0x8] sm:$0xff] %v1010
        %s1014 = sld [smem:[#allocation5 + $0x81]]
        %s1015 = sld [smem:[#allocation8 + $0x81]]
        %v1016 = vstv %s1014
        %v1017 = vmul.f32 %v1016, %v420
        %v1018 = vmul.f32 %v1016, %v421
        %v1019 = vstv %s1015
        %v1020 = vmul.f32 %v1019, %v420
        %v1021 = vmul.f32 %v1019, %v421
        %s1022 = sld [smem:[#allocation5 + $0x101]]
        %s1023 = sld [smem:[#allocation8 + $0x101]]
        %v1024 = vstv %s1022
        %v1025 = vmul.f32 %v1024, %v414
        %v1026 = vmul.f32 %v1024, %v415
        %v1027 = vadd.f32 %v1017, %v1025
        %v1028 = vadd.f32 %v1018, %v1026
        %v1029 = vstv %s1023
        %v1030 = vmul.f32 %v1029, %v414
        %v1031 = vmul.f32 %v1029, %v415
        %v1032 = vadd.f32 %v1020, %v1030
        %v1033 = vadd.f32 %v1021, %v1031
        %s1034 = sld [smem:[#allocation5 + $0x181]]
        %s1035 = sld [smem:[#allocation8 + $0x181]]
        %v1036 = vstv %s1034
        %v1037 = vmul.f32 %v1036, %v422
        %v1038 = vmul.f32 %v1036, %v423
        %v1039 = vadd.f32 %v1027, %v1037
        %v1040 = vadd.f32 %v1028, %v1038
        %v1041 = vstv %s1035
        %v1042 = vmul.f32 %v1041, %v422
        %v1043 = vmul.f32 %v1041, %v423
        %v1044 = vadd.f32 %v1032, %v1042
        %v1045 = vadd.f32 %v1033, %v1043
        %s1046 = sld [smem:[#allocation5 + $0x201]]
        %s1047 = sld [smem:[#allocation8 + $0x201]]
        %v1048 = vstv %s1046
        %v1049 = vmul.f32 %v1048, %v426
        %v1050 = vmul.f32 %v1048, %v427
        %v1051 = vadd.f32 %v1039, %v1049
        %v1052 = vadd.f32 %v1040, %v1050
        %v1053 = vstv %s1047
        %v1054 = vmul.f32 %v1053, %v426
        %v1055 = vmul.f32 %v1053, %v427
        %v1056 = vadd.f32 %v1044, %v1054
        %v1057 = vadd.f32 %v1045, %v1055
        %s1058 = sld [smem:[#allocation5 + $0x281]]
        %s1059 = sld [smem:[#allocation8 + $0x281]]
        %v1060 = vstv %s1058
        %v1061 = vmul.f32 %v1060, %v424
        %v1062 = vmul.f32 %v1060, %v425
        %v1063 = vadd.f32 %v1051, %v1061
        %v1064 = vadd.f32 %v1052, %v1062
        %v1065 = vstv %s1059
        %v1066 = vmul.f32 %v1065, %v424
        %v1067 = vmul.f32 %v1065, %v425
        %v1068 = vadd.f32 %v1056, %v1066
        %v1069 = vadd.f32 %v1057, %v1067
        %s1070 = sld [smem:[#allocation5 + $0x1]]
        %s1071 = ssub.f32 %s1070, 0.5
        %v1072 = vstv %s1071
        %v1073 = vadd.f32 %v1063, %v1072
        %v1074 = vadd.f32 %v1064, %v1072
        %s1075 = sld [smem:[#allocation8 + $0x1]]
        %v1076 = vstv %s1075
        %v1077 = vadd.f32 %v1068, %v1076
        %v1078 = vadd.f32 %v1069, %v1076
        %v1079 = vadd.f32 %v1073, 0.5
        %v1080 = vadd.f32 %v1074, 0.5
        %v1081 = vfloor.f32 %v1079
        %v1082 = vfloor.f32 %v1080
        %v1083 = vsub.f32 %v1073, %v1081
        %v1084 = vsub.f32 %v1074, %v1082
        %v1085 = vmul.f32 %v1083, 2.0
        %v1086 = vmul.f32 %v1084, 2.0
        %v1087 = vadd.f32 %v1085, 0.5
        %v1088 = vadd.f32 %v1086, 0.5
        %v1089 = vfloor.f32 %v1087
        %v1090 = vfloor.f32 %v1088
        %v1091 = vmul.f32 %v1089, 0.5
        %v1092 = vmul.f32 %v1090, 0.5
        %v1093 = vsub.f32 %v1083, %v1091
        %v1094 = vsub.f32 %v1084, %v1092
        %v1095 = vand.u32 2147483647, %v1089
        %v1096 = vand.u32 2147483647, %v1090
        %v1097 = vmul.f32 %v1095, 2.0
        %v1098 = vmul.f32 %v1096, 2.0
        %v1099 = vsub.f32 1.0, %v1097
        %v1100 = vsub.f32 1.0, %v1098
        %v1101 = vmul.f32 %v1093, 6.2831855
        %v1102 = vmul.f32 %v1094, 6.2831855
        %v1103 = vmul.f32 %v1101, %v1101
        %v1104 = vmul.f32 %v1102, %v1102
        %v1105 = vmul.f32 %v1103, -2.5052108e-08
        %v1106 = vmul.f32 %v1104, -2.5052108e-08
        %v1107 = vadd.f32 %v1105, 2.7557319e-06
        %v1108 = vadd.f32 %v1106, 2.7557319e-06
        %v1109 = vmul.f32 %v1103, %v1107
        %v1110 = vmul.f32 %v1104, %v1108
        %v1111 = vadd.f32 %v1109, -0.0001984127
        %v1112 = vadd.f32 %v1110, -0.0001984127
        %v1113 = vmul.f32 %v1103, %v1111
        %v1114 = vmul.f32 %v1104, %v1112
        %v1115 = vadd.f32 %v1113, 0.008333334
        %v1116 = vadd.f32 %v1114, 0.008333334
        %v1117 = vmul.f32 %v1103, %v1115
        %v1118 = vmul.f32 %v1104, %v1116
        %v1119 = vadd.f32 %v1117, -0.16666667
        %v1120 = vadd.f32 %v1118, -0.16666667
        %v1121 = vmul.f32 %v1103, %v1119
        %v1122 = vmul.f32 %v1104, %v1120
        %v1123 = vadd.f32 %v1121, 1.0
        %v1124 = vadd.f32 %v1122, 1.0
        %v1125 = vmul.f32 %v1101, %v1123
        %v1126 = vmul.f32 %v1102, %v1124
        %v1127 = vmul.f32 %v1103, -2.755732e-07
        %v1128 = vmul.f32 %v1104, -2.755732e-07
        %v1129 = vadd.f32 %v1127, 2.4801588e-05
        %v1130 = vadd.f32 %v1128, 2.4801588e-05
        %v1131 = vmul.f32 %v1103, %v1129
        %v1132 = vmul.f32 %v1104, %v1130
        %v1133 = vadd.f32 %v1131, -0.0013888889
        %v1134 = vadd.f32 %v1132, -0.0013888889
        %v1135 = vmul.f32 %v1103, %v1133
        %v1136 = vmul.f32 %v1104, %v1134
        %v1137 = vadd.f32 %v1135, 0.041666668
        %v1138 = vadd.f32 %v1136, 0.041666668
        %v1139 = vmul.f32 %v1103, %v1137
        %v1140 = vmul.f32 %v1104, %v1138
        %v1141 = vadd.f32 %v1139, -0.5
        %v1142 = vadd.f32 %v1140, -0.5
        %v1143 = vmul.f32 %v1103, %v1141
        %v1144 = vmul.f32 %v1104, %v1142
        %v1145 = vadd.f32 %v1143, 1.0
        %v1146 = vadd.f32 %v1144, 1.0
        %v1147 = vmul.f32 %v1099, %v1145
        %v1148 = vmul.f32 %v1100, %v1146
        %v1149 = vmul.f32 %v1099, %v1125
        %v1150 = vmul.f32 %v1100, %v1126
        %v1151 = vmul.f32 %v1077, %v1147
        %v1152 = vmul.f32 %v1078, %v1148
        %s1153 = scalar_lea.vmem %s380, 64 [#allocation10]
        %1154 = vst [vmem:[%s1153] sm:$0xff] %v1151
        %1155 = vst [vmem:[%s1153 + $0x8] sm:$0xff] %v1152
        %v1156 = vmul.f32 %v1077, %v1149
        %v1157 = vmul.f32 %v1078, %v1150
        %s1158 = scalar_lea.vmem %s387, 64 [#allocation11]
        %1159 = vst [vmem:[%s1158] sm:$0xff] %v1156
        %1160 = vst [vmem:[%s1158 + $0x8] sm:$0xff] %v1157
        %s1161 = sld [smem:[#allocation5 + $0x82]]
        %s1162 = sld [smem:[#allocation8 + $0x82]]
        %v1163 = vstv %s1161
        %v1164 = vmul.f32 %v1163, %v420
        %v1165 = vmul.f32 %v1163, %v421
        %v1166 = vstv %s1162
        %v1167 = vmul.f32 %v1166, %v420
        %v1168 = vmul.f32 %v1166, %v421
        %s1169 = sld [smem:[#allocation5 + $0x102]]
        %s1170 = sld [smem:[#allocation8 + $0x102]]
        %v1171 = vstv %s1169
        %v1172 = vmul.f32 %v1171, %v414
        %v1173 = vmul.f32 %v1171, %v415
        %v1174 = vadd.f32 %v1164, %v1172
        %v1175 = vadd.f32 %v1165, %v1173
        %v1176 = vstv %s1170
        %v1177 = vmul.f32 %v1176, %v414
        %v1178 = vmul.f32 %v1176, %v415
        %v1179 = vadd.f32 %v1167, %v1177
        %v1180 = vadd.f32 %v1168, %v1178
        %s1181 = sld [smem:[#allocation5 + $0x182]]
        %s1182 = sld [smem:[#allocation8 + $0x182]]
        %v1183 = vstv %s1181
        %v1184 = vmul.f32 %v1183, %v422
        %v1185 = vmul.f32 %v1183, %v423
        %v1186 = vadd.f32 %v1174, %v1184
        %v1187 = vadd.f32 %v1175, %v1185
        %v1188 = vstv %s1182
        %v1189 = vmul.f32 %v1188, %v422
        %v1190 = vmul.f32 %v1188, %v423
        %v1191 = vadd.f32 %v1179, %v1189
        %v1192 = vadd.f32 %v1180, %v1190
        %s1193 = sld [smem:[#allocation5 + $0x202]]
        %s1194 = sld [smem:[#allocation8 + $0x202]]
        %v1195 = vstv %s1193
        %v1196 = vmul.f32 %v1195, %v426
        %v1197 = vmul.f32 %v1195, %v427
        %v1198 = vadd.f32 %v1186, %v1196
        %v1199 = vadd.f32 %v1187, %v1197
        %v1200 = vstv %s1194
        %v1201 = vmul.f32 %v1200, %v426
        %v1202 = vmul.f32 %v1200, %v427
        %v1203 = vadd.f32 %v1191, %v1201
        %v1204 = vadd.f32 %v1192, %v1202
        %s1205 = sld [smem:[#allocation5 + $0x282]]
        %s1206 = sld [smem:[#allocation8 + $0x282]]
        %v1207 = vstv %s1205
        %v1208 = vmul.f32 %v1207, %v424
        %v1209 = vmul.f32 %v1207, %v425
        %v1210 = vadd.f32 %v1198, %v1208
        %v1211 = vadd.f32 %v1199, %v1209
        %v1212 = vstv %s1206
        %v1213 = vmul.f32 %v1212, %v424
        %v1214 = vmul.f32 %v1212, %v425
        %v1215 = vadd.f32 %v1203, %v1213
        %v1216 = vadd.f32 %v1204, %v1214
        %s1217 = sld [smem:[#allocation5 + $0x2]]
        %s1218 = ssub.f32 %s1217, 0.5
        %v1219 = vstv %s1218
        %v1220 = vadd.f32 %v1210, %v1219
        %v1221 = vadd.f32 %v1211, %v1219
        %s1222 = sld [smem:[#allocation8 + $0x2]]
        %v1223 = vstv %s1222
        %v1224 = vadd.f32 %v1215, %v1223
        %v1225 = vadd.f32 %v1216, %v1223
        %v1226 = vadd.f32 %v1220, 0.5
        %v1227 = vadd.f32 %v1221, 0.5
        %v1228 = vfloor.f32 %v1226
        %v1229 = vfloor.f32 %v1227
        %v1230 = vsub.f32 %v1220, %v1228
        %v1231 = vsub.f32 %v1221, %v1229
        %v1232 = vmul.f32 %v1230, 2.0
        %v1233 = vmul.f32 %v1231, 2.0
        %v1234 = vadd.f32 %v1232, 0.5
        %v1235 = vadd.f32 %v1233, 0.5
        %v1236 = vfloor.f32 %v1234
        %v1237 = vfloor.f32 %v1235
        %v1238 = vmul.f32 %v1236, 0.5
        %v1239 = vmul.f32 %v1237, 0.5
        %v1240 = vsub.f32 %v1230, %v1238
        %v1241 = vsub.f32 %v1231, %v1239
        %v1242 = vand.u32 2147483647, %v1236
        %v1243 = vand.u32 2147483647, %v1237
        %v1244 = vmul.f32 %v1242, 2.0
        %v1245 = vmul.f32 %v1243, 2.0
        %v1246 = vsub.f32 1.0, %v1244
        %v1247 = vsub.f32 1.0, %v1245
        %v1248 = vmul.f32 %v1240, 6.2831855
        %v1249 = vmul.f32 %v1241, 6.2831855
        %v1250 = vmul.f32 %v1248, %v1248
        %v1251 = vmul.f32 %v1249, %v1249
        %v1252 = vmul.f32 %v1250, -2.5052108e-08
        %v1253 = vmul.f32 %v1251, -2.5052108e-08
        %v1254 = vadd.f32 %v1252, 2.7557319e-06
        %v1255 = vadd.f32 %v1253, 2.7557319e-06
        %v1256 = vmul.f32 %v1250, %v1254
        %v1257 = vmul.f32 %v1251, %v1255
        %v1258 = vadd.f32 %v1256, -0.0001984127
        %v1259 = vadd.f32 %v1257, -0.0001984127
        %v1260 = vmul.f32 %v1250, %v1258
        %v1261 = vmul.f32 %v1251, %v1259
        %v1262 = vadd.f32 %v1260, 0.008333334
        %v1263 = vadd.f32 %v1261, 0.008333334
        %v1264 = vmul.f32 %v1250, %v1262
        %v1265 = vmul.f32 %v1251, %v1263
        %v1266 = vadd.f32 %v1264, -0.16666667
        %v1267 = vadd.f32 %v1265, -0.16666667
        %v1268 = vmul.f32 %v1250, %v1266
        %v1269 = vmul.f32 %v1251, %v1267
        %v1270 = vadd.f32 %v1268, 1.0
        %v1271 = vadd.f32 %v1269, 1.0
        %v1272 = vmul.f32 %v1248, %v1270
        %v1273 = vmul.f32 %v1249, %v1271
        %v1274 = vmul.f32 %v1250, -2.755732e-07
        %v1275 = vmul.f32 %v1251, -2.755732e-07
        %v1276 = vadd.f32 %v1274, 2.4801588e-05
        %v1277 = vadd.f32 %v1275, 2.4801588e-05
        %v1278 = vmul.f32 %v1250, %v1276
        %v1279 = vmul.f32 %v1251, %v1277
        %v1280 = vadd.f32 %v1278, -0.0013888889
        %v1281 = vadd.f32 %v1279, -0.0013888889
        %v1282 = vmul.f32 %v1250, %v1280
        %v1283 = vmul.f32 %v1251, %v1281
        %v1284 = vadd.f32 %v1282, 0.041666668
        %v1285 = vadd.f32 %v1283, 0.041666668
        %v1286 = vmul.f32 %v1250, %v1284
        %v1287 = vmul.f32 %v1251, %v1285
        %v1288 = vadd.f32 %v1286, -0.5
        %v1289 = vadd.f32 %v1287, -0.5
        %v1290 = vmul.f32 %v1250, %v1288
        %v1291 = vmul.f32 %v1251, %v1289
        %v1292 = vadd.f32 %v1290, 1.0
        %v1293 = vadd.f32 %v1291, 1.0
        %v1294 = vmul.f32 %v1246, %v1292
        %v1295 = vmul.f32 %v1247, %v1293
        %v1296 = vmul.f32 %v1246, %v1272
        %v1297 = vmul.f32 %v1247, %v1273
        %v1298 = vmul.f32 %v1224, %v1294
        %v1299 = vmul.f32 %v1225, %v1295
        %s1300 = scalar_lea.vmem %s380, 80 [#allocation10]
        %1301 = vst [vmem:[%s1300] sm:$0xff] %v1298
        %1302 = vst [vmem:[%s1300 + $0x8] sm:$0xff] %v1299
        %v1303 = vmul.f32 %v1224, %v1296
        %v1304 = vmul.f32 %v1225, %v1297
        %s1305 = scalar_lea.vmem %s387, 80 [#allocation11]
        %1306 = vst [vmem:[%s1305] sm:$0xff] %v1303
        %1307 = vst [vmem:[%s1305 + $0x8] sm:$0xff] %v1304
        %s1308 = sand.u32 %s190, 1
        %s1309 = scalar_lea.sflag [#allocation3], %s1308
        %s1310 = sand.u32 %s190, 1
        %s1311 = smul.addr %s1310, 96
        %s1312 = scalar_lea.vmem [#allocation10], %s1311
        %s1313 = sand.u32 %s218, 1
        %s1314 = scalar_lea.sflag [#allocation12], %s1313
        %s1315 = sand.u32 %s218, 1
        %s1316 = smul.addr %s1315, 96
        %s1317 = scalar_lea.vmem [#allocation11], %s1316
        // Predicated region
        $region61: #{tpu_custom_call.1} parent=43 // pred_check
          %p1318 = pneg %p200
        $region62: #{tpu_custom_call.1} parent=43 // pred_check_branch
          %1320 = sbr.rel (%p1318) target = $region64
        $region63: #{tpu_custom_call.1} parent=43 // pred_region
          %s1321 = smul.u32 2, %s33
          %s1323 = ssub.s32 1536, 1536
          %1324 = vsyncadd %s1309, %s1323
          %s1325 = smul.addr %s32, 2
          %s1326 = sadd.s32 %s1321, %s1325
          %s1327 = smul.addr %s1326, 128
          %s1328 = scalar_lea.hbm %s6, %s1327
          %s1329 = sshll.u32 %s1312, 4
          %s1330 = int_to_ptr.vmem [resolvable:$true] %s1329
          %1335 = dma.vmem_to_hbm [thread:$0]  %s1330, 1536, %s1328, %s1309, 256, 512, 16
        $region64: #{tpu_custom_call.1} parent=43 // pred_fallthru
          _
        // Predicated region
        $region65: #{tpu_custom_call.1} parent=43 // pred_check
          %p1336 = pneg %p228
        $region66: #{tpu_custom_call.1} parent=43 // pred_check_branch
          %1338 = sbr.rel (%p1336) target = $region68
        $region67: #{tpu_custom_call.1} parent=43 // pred_region
          %s1339 = smul.u32 2, %s33
          %s1341 = ssub.s32 1536, 1536
          %1342 = vsyncadd %s1314, %s1341
          %s1343 = smul.addr %s32, 2
          %s1344 = sadd.s32 %s1339, %s1343
          %s1345 = smul.addr %s1344, 128
          %s1346 = scalar_lea.hbm %s7, %s1345
          %s1347 = sshll.u32 %s1317, 4
          %s1348 = int_to_ptr.vmem [resolvable:$true] %s1347
          %1353 = dma.vmem_to_hbm [thread:$0]  %s1348, 1536, %s1346, %s1314, 256, 512, 16
        $region68: #{tpu_custom_call.1} parent=43 // pred_fallthru
          _
      $region44: #{tpu_custom_call.1} parent=5 // pred_fallthru
        _
      %p1354 = scmp.le.s32.totalorder 2, %s23
      // Predicated region
      $region69: #{tpu_custom_call.1} parent=5 // pred_check
        %p1355 = pneg %p1354
      $region70: #{tpu_custom_call.1} parent=5 // pred_check_branch
        %1357 = sbr.rel (%p1355) target = $region72
      $region71: #{tpu_custom_call.1} parent=5 // pred_region
        %s1358 = ssub.s32 %s23, 2
        // Predicated region
        $region73: #{tpu_custom_call.1} parent=71 // pred_check
          %p1359 = pneg %p206
        $region74: #{tpu_custom_call.1} parent=71 // pred_check_branch
          %1361 = sbr.rel (%p1359) target = $region76
        $region75: #{tpu_custom_call.1} parent=71 // pred_region
          %s1362 = sand.u32 %s191, 1
          %s1363 = scalar_lea.sflag [#allocation3], %s1362
          %s1364 = sand.u32 %s191, 1
          %s1365 = smul.addr %s1364, 96
          %s1366 = scalar_lea.vmem [#allocation10], %s1365
          %1367 = dma.done %s1363, 1536
        $region76: #{tpu_custom_call.1} parent=71 // pred_fallthru
          _
        // Predicated region
        $region77: #{tpu_custom_call.1} parent=71 // pred_check
          %p1368 = pneg %p234
        $region78: #{tpu_custom_call.1} parent=71 // pred_check_branch
          %1370 = sbr.rel (%p1368) target = $region80
        $region79: #{tpu_custom_call.1} parent=71 // pred_region
          %s1371 = sand.u32 %s219, 1
          %s1372 = scalar_lea.sflag [#allocation12], %s1371
          %s1373 = sand.u32 %s219, 1
          %s1374 = smul.addr %s1373, 96
          %s1375 = scalar_lea.vmem [#allocation11], %s1374
          %1376 = dma.done %s1372, 1536
        $region80: #{tpu_custom_call.1} parent=71 // pred_fallthru
          _
      $region72: #{tpu_custom_call.1} parent=5 // pred_fallthru
        _
    $region6: #{tpu_custom_call.1} parent=1 // loop_footer
      %s27 = sadd.s32 1, %s23
    $region7: #{tpu_custom_call.1} parent=1 // loop_footer_branch
      %22 = sbr.rel target = $region3
    $region8: #{tpu_custom_call.1} parent=1 // loop_exit
      _
    %1377 = vsyncpa [#allocation3], 1
    %s1378 = scalar_lea.sflag [#allocation3], 1
    %1379 = vsyncpa %s1378, 1
    %1380 = vsyncpa [#allocation12], 1
    %s1381 = scalar_lea.sflag [#allocation12], 1
    %1382 = vsyncpa %s1381, 1
    %1383 = vsyncpa [#allocation4], 1
    %s1384 = scalar_lea.sflag [#allocation4], 1
    %1385 = vsyncpa %s1384, 1
    %1386 = vsyncpa [#allocation6], 1
    %1387 = vsyncpa [#allocation9], 1

</llo_original>
